<compile_context>
chip_gen: v5e
topology: v5e:2x2
jax: 0.10.0
libtpu: 0.0.40
codegen_flags: <defaults>
</compile_context>

<pallas_src>
import jax
import jax.numpy as jnp
import numpy as np
from jax.experimental import pallas as pl
from jax.experimental.pallas import tpu as pltpu


def _make_kernel(N, K, pad, L1, L1p, Cp, HALO, Lp, eps=1e-5):
    """Fused ConvBlock kernel for static N, K, pad, L1, L1p, Cp, HALO, Lp."""
    f32 = jnp.float32
    inv_cnt = 1.0 / float(N * L1)          # true element count for BN stats
    need_mask = (L1 != L1p)
    base = HALO - pad                       # first tap's row offset into s1/s2

    def kernel(x_ref, w1, g1, be1, w2, g2, be2, w3, g3, be3,
               out_ref, s1, s2, res):
        # Row-validity mask: rows l >= L1 inside each sample's L1p slab are
        # padding ("junk") rows; exclude them from BN stats and write them back
        # as zeros so the next stage's rear-halo reads stay exact.
        if need_mask:
            row_ids = jax.lax.broadcasted_iota(jnp.int32, (L1p, 1), 0)
            valid = row_ids < L1
            mask_rows = lambda y: jnp.where(valid, y, 0.0)
        else:
            mask_rows = lambda y: y

        # Zero the front/rear halo rows of both scratch slabs ONCE.
        zhalo = jnp.zeros((N, HALO, Cp), s1.dtype)
        s1[:, :HALO, :] = zhalo
        s1[:, HALO + L1p:, :] = zhalo
        s2[:, :HALO, :] = zhalo
        s2[:, HALO + L1p:, :] = zhalo

        def conv(src_ref, row0, w_ref):
            # K accumulated per-tap MXU matmuls per sample, reading in-place
            # views of the source slab (no im2col concat, no bf16 temp).
            ys = []
            for n in range(N):                               # static unroll
                acc = jnp.dot(src_ref[n, row0:row0 + L1p, :], w_ref[0],
                              preferred_element_type=f32)
                for k in range(1, K):
                    acc = acc + jnp.dot(
                        src_ref[n, row0 + k:row0 + k + L1p, :], w_ref[k],
                        preferred_element_type=f32)
                ys.append(acc)                                # (L1p, Cp) f32
            return ys

        def batchnorm(ys, g_ref, be_ref, relu):
            # Training-mode BN over (batch x valid positions), two-pass stats.
            s = jnp.zeros((1, Cp), f32)
            for y in ys:
                s = s + jnp.sum(mask_rows(y), axis=0, keepdims=True)
            m = s * inv_cnt
            v = jnp.zeros((1, Cp), f32)
            for y in ys:
                d = y - m
                v = v + jnp.sum(mask_rows(d * d), axis=0, keepdims=True)
            v = v * inv_cnt                                   # biased variance
            scale = jax.lax.rsqrt(v + eps) * g_ref[...]
            outs = []
            for y in ys:
                o = (y - m) * scale + be_ref[...]
                if relu:
                    o = jnp.maximum(o, 0.0)
                outs.append(mask_rows(o))         # zero junk rows before store
            return outs

        # ---- scale branch: (folded stride-2/dilation-2) conv + BN + ReLU ----
        a1 = batchnorm(conv(x_ref, 0, w1), g1, be1, relu=True)
        for n in range(N):
            res[n, :, :] = a1[n]                              # f32 skip path
            s1[n, HALO:HALO + L1p, :] = a1[n].astype(s1.dtype)

        # ---- res conv #1: conv + BN + ReLU ----------------------------------
        a2 = batchnorm(conv(s1, base, w2), g2, be2, relu=True)
        for n in range(N):
            s2[n, HALO:HALO + L1p, :] = a2[n].astype(s2.dtype)

        # ---- res conv #2: conv + BN, residual add (f32), final ReLU ---------
        a3 = batchnorm(conv(s2, base, w3), g3, be3, relu=False)
        for n in range(N):
            out_ref[n, :, :] = jnp.maximum(a3[n] + res[n, :, :], 0.0)

    return kernel


def conv_block_forward(x, params, *, size, stride=2, eps=1e-5):
    """x: (N, C_in, L) float32 (PyTorch Conv1d layout). Returns (N, C_out, L1)."""
    dilation = 2                        # hard-coded in the PyTorch module
    N, c_in, L = x.shape
    K = size
    pad = size // 2
    assert K % 2 == 1 and K >= 3, "residual add requires odd kernel size >= 3"
    assert stride == 2 and dilation == 2, "wrapper folds stride==dilation==2"
    L1 = (L + 2 * pad - dilation * (K - 1) - 1) // stride + 1
    Lsub = L1 + K - 1                        # rows of the stride-folded input
    hidden = params["w1"].shape[0]

    Cp = ((max(c_in, hidden) + 127) // 128) * 128   # lane-dense channel pad
    L1p = ((L1 + 15) // 16) * 16             # bf16 packing granule (16 rows)
    HALO = 16                                 # sublane-aligned front halo
    assert pad <= HALO
    Lp = HALO + L1p + HALO                    # front halo | slab | rear halo
    Lx = ((K - 1 + L1p + 15) // 16) * 16      # stride-folded input slab rows

    # Glue: channels-last, zero-pad channels to Cp, pad L, and fold the
    # stride==dilation==2 conv into a stride-1 conv over even padded positions.
    x_nlc = jnp.transpose(x, (0, 2, 1)).astype(jnp.float32)
    x_nlc = jnp.pad(x_nlc, ((0, 0), (pad, pad), (0, Cp - c_in)))
    x_sub = x_nlc[:, ::stride, :][:, :Lsub, :]
    x_sub = jnp.pad(x_sub, ((0, 0), (0, Lx - Lsub), (0, 0))).astype(jnp.bfloat16)

    def wkcc(w):
        # PyTorch (C_out, C_in, K) -> per-tap weights (K, Cp, Cp), bf16.
        c_out, ci, _ = w.shape
        wt = jnp.transpose(w, (2, 1, 0)).astype(jnp.float32)    # (K, C_in, C_out)
        wt = jnp.pad(wt, ((0, 0), (0, Cp - ci), (0, Cp - c_out)))
        return wt.astype(jnp.bfloat16)

    def row(v):
        return jnp.pad(v.astype(jnp.float32), (0, Cp - v.shape[0])).reshape(1, Cp)

    # Note: conv biases b1/b2/b3 are intentionally NOT passed: training-mode BN
    # subtracts the batch mean immediately after each conv, so they cancel.
    ins = [
        x_sub,
        wkcc(params["w1"]), row(params["g1"]), row(params["be1"]),
        wkcc(params["w2"]), row(params["g2"]), row(params["be2"]),
        wkcc(params["w3"]), row(params["g3"]), row(params["be3"]),
    ]

    def full_spec(shape):
        return pl.BlockSpec(shape, lambda i: (0,) * len(shape))

    # Explicit VMEM budget: resident inputs/outputs (double-buffered by the
    # BlockSpec pipeline) + scratch + headroom, capped by device capacity.
    in_bytes = sum(int(a.size) * a.dtype.itemsize for a in ins)
    out_bytes = N * L1p * Cp * 4
    scratch_bytes = 2 * N * Lp * Cp * 2 + N * L1p * Cp * 4
    budget = 2 * (in_bytes + out_bytes) + scratch_bytes + (4 << 20)
    try:
        vmem_cap = int(pltpu.get_tpu_info().vmem_capacity_bytes)
    except Exception:
        vmem_cap = 64 << 20                   # conservative (v7x physical)
    vmem_limit = int(max(16 << 20, min(vmem_cap - (12 << 20),
                                       max(32 << 20, budget))))

    y = pl.pallas_call(
        _make_kernel(N=N, K=K, pad=pad, L1=L1, L1p=L1p, Cp=Cp, HALO=HALO,
                     Lp=Lp, eps=eps),
        out_shape=jax.ShapeDtypeStruct((N, L1p, Cp), jnp.float32),
        grid=(1,),
        in_specs=[full_spec(a.shape) for a in ins],
        out_specs=full_spec((N, L1p, Cp)),
        scratch_shapes=[pltpu.VMEM((N, Lp, Cp), jnp.bfloat16),
                        pltpu.VMEM((N, Lp, Cp), jnp.bfloat16),
                        pltpu.VMEM((N, L1p, Cp), jnp.float32)],
        compiler_params=pltpu.CompilerParams(
            dimension_semantics=("arbitrary",),
            vmem_limit_bytes=vmem_limit),
    )(*ins)

    y = y[:, :L1, :hidden]                    # drop row/channel padding
    return jnp.transpose(y, (0, 2, 1))        # back to (N, C, L_out)


def ref_forward(x, p, *, size, stride=2, eps=1e-5):
    """Pure-JAX reference mirroring PyTorch ConvBlock.forward (training-mode BN)."""
    pad = size // 2

    def conv(x, w, b, stride=1, dilation=1):
        y = jax.lax.conv_general_dilated(
            x, w, window_strides=(stride,), padding=[(pad, pad)],
            rhs_dilation=(dilation,), dimension_numbers=("NCH", "OIH", "NCH"))
        return y + b[None, :, None]

    def bn(y, g, be):
        m = jnp.mean(y, axis=(0, 2), keepdims=True)
        v = jnp.mean((y - m) ** 2, axis=(0, 2), keepdims=True)
        return (y - m) * jax.lax.rsqrt(v + eps) * g[None, :, None] + be[None, :, None]

    scaled = jax.nn.relu(bn(conv(x, p["w1"], p["b1"], stride=stride, dilation=2),
                            p["g1"], p["be1"]))
    r = jax.nn.relu(bn(conv(scaled, p["w2"], p["b2"]), p["g2"], p["be2"]))
    r = bn(conv(r, p["w3"], p["b3"]), p["g3"], p["be3"])
    return jax.nn.relu(r + scaled)


if __name__ == "__main__":
    size, stride = 3, 2
    hidden_in, hidden = 64, 64
    N, L = 2, 16

    key = jax.random.PRNGKey(0)
    k1, k2, k3, kb1, kb2, kb3, kx = jax.random.split(key, 7)

    def conv_w(k, c_out, c_in):
        return jax.random.normal(k, (c_out, c_in, size), jnp.float32) / np.sqrt(c_in * size)

    params = {
        "w1": conv_w(k1, hidden, hidden_in),
        "b1": 0.1 * jax.random.normal(kb1, (hidden,), jnp.float32),
        "g1": jnp.ones((hidden,), jnp.float32),
        "be1": jnp.zeros((hidden,), jnp.float32),
        "w2": conv_w(k2, hidden, hidden),
        "b2": 0.1 * jax.random.normal(kb2, (hidden,), jnp.float32),
        "g2": jnp.ones((hidden,), jnp.float32),
        "be2": jnp.zeros((hidden,), jnp.float32),
        "w3": conv_w(k3, hidden, hidden),
        "b3": 0.1 * jax.random.normal(kb3, (hidden,), jnp.float32),
        "g3": jnp.ones((hidden,), jnp.float32),
        "be3": jnp.zeros((hidden,), jnp.float32),
    }

    x = jax.random.normal(kx, (N, hidden_in, L), jnp.float32)

    out = conv_block_forward(x, params, size=size, stride=stride)
    out = jax.block_until_ready(out)

    ref = ref_forward(x, params, size=size, stride=stride)
    # Tolerance accounts for bf16 matmul inputs (f32 accumulation) across three
    # conv stages; the skip connection itself stays f32.
    np.testing.assert_allclose(np.asarray(out), np.asarray(ref), rtol=3e-2, atol=3e-2)

    print("KERNEL_OK")
</pallas_src>

<mosaic_0001>
module attributes {stable_mosaic.version = 11 : i64} {
  func.func @kernel(%arg0: i32, %arg1: memref<2x32x128xbf16, #tpu.memory_space<vmem>>, %arg2: memref<3x128x128xbf16, #tpu.memory_space<vmem>>, %arg3: memref<1x128xf32, #tpu.memory_space<vmem>>, %arg4: memref<1x128xf32, #tpu.memory_space<vmem>>, %arg5: memref<3x128x128xbf16, #tpu.memory_space<vmem>>, %arg6: memref<1x128xf32, #tpu.memory_space<vmem>>, %arg7: memref<1x128xf32, #tpu.memory_space<vmem>>, %arg8: memref<3x128x128xbf16, #tpu.memory_space<vmem>>, %arg9: memref<1x128xf32, #tpu.memory_space<vmem>>, %arg10: memref<1x128xf32, #tpu.memory_space<vmem>>, %arg11: memref<2x16x128xf32, #tpu.memory_space<vmem>>, %arg12: memref<2x48x128xbf16, #tpu.memory_space<vmem>>, %arg13: memref<2x48x128xbf16, #tpu.memory_space<vmem>>, %arg14: memref<2x16x128xf32, #tpu.memory_space<vmem>>) attributes {dimension_semantics = [#tpu.dimension_semantics<arbitrary>], iteration_bounds = array<i64: 1>, scalar_prefetch = 0 : i64, scratch_operands = 3 : i64, tpu.core_type = #tpu.core_type<tc>, window_params = [{pipeline_mode = #tpu.pipeline_mode<synchronous>, transform_indices = @transform_0, window_bounds = array<i64: 2, 32, 128>}, {pipeline_mode = #tpu.pipeline_mode<synchronous>, transform_indices = @transform_1, window_bounds = array<i64: 3, 128, 128>}, {pipeline_mode = #tpu.pipeline_mode<synchronous>, transform_indices = @transform_2, window_bounds = array<i64: 1, 128>}, {pipeline_mode = #tpu.pipeline_mode<synchronous>, transform_indices = @transform_3, window_bounds = array<i64: 1, 128>}, {pipeline_mode = #tpu.pipeline_mode<synchronous>, transform_indices = @transform_4, window_bounds = array<i64: 3, 128, 128>}, {pipeline_mode = #tpu.pipeline_mode<synchronous>, transform_indices = @transform_5, window_bounds = array<i64: 1, 128>}, {pipeline_mode = #tpu.pipeline_mode<synchronous>, transform_indices = @transform_6, window_bounds = array<i64: 1, 128>}, {pipeline_mode = #tpu.pipeline_mode<synchronous>, transform_indices = @transform_7, window_bounds = array<i64: 3, 128, 128>}, {pipeline_mode = #tpu.pipeline_mode<synchronous>, transform_indices = @transform_8, window_bounds = array<i64: 1, 128>}, {pipeline_mode = #tpu.pipeline_mode<synchronous>, transform_indices = @transform_9, window_bounds = array<i64: 1, 128>}, {pipeline_mode = #tpu.pipeline_mode<synchronous>, transform_indices = @transform_10, window_bounds = array<i64: 2, 16, 128>}]} {
    %0 = tpu.iota {dimensions = array<i32: 0>} : vector<16x1xi32>
    %c7_i32 = arith.constant 7 : i32
    %1 = vector.broadcast %c7_i32 : i32 to vector<16x1xi32>
    %2 = arith.cmpi slt, %0, %1 : vector<16x1xi32>
    %cst = arith.constant 0.000000e+00 : bf16
    %3 = vector.broadcast %cst : bf16 to vector<2x16x128xbf16>
    %c0 = arith.constant 0 : index
    %c0_0 = arith.constant 0 : index
    %c0_1 = arith.constant 0 : index
    %4 = vector.load %arg12[%c0, %c0_0, %c0_1] : memref<2x48x128xbf16, #tpu.memory_space<vmem>>, vector<2x16x128xbf16>
    tpu.vector_store %arg12[%c0, %c0_0, %c0_1], %3 {strides = array<i32>} : memref<2x48x128xbf16, #tpu.memory_space<vmem>>, vector<2x16x128xbf16>,
    %c0_2 = arith.constant 0 : index
    %c32 = arith.constant 32 : index
    %c0_3 = arith.constant 0 : index
    %5 = vector.load %arg12[%c0_2, %c32, %c0_3] : memref<2x48x128xbf16, #tpu.memory_space<vmem>>, vector<2x16x128xbf16>
    tpu.vector_store %arg12[%c0_2, %c32, %c0_3], %3 {strides = array<i32>} : memref<2x48x128xbf16, #tpu.memory_space<vmem>>, vector<2x16x128xbf16>,
    %c0_4 = arith.constant 0 : index
    %c0_5 = arith.constant 0 : index
    %c0_6 = arith.constant 0 : index
    %6 = vector.load %arg13[%c0_4, %c0_5, %c0_6] : memref<2x48x128xbf16, #tpu.memory_space<vmem>>, vector<2x16x128xbf16>
    tpu.vector_store %arg13[%c0_4, %c0_5, %c0_6], %3 {strides = array<i32>} : memref<2x48x128xbf16, #tpu.memory_space<vmem>>, vector<2x16x128xbf16>,
    %c0_7 = arith.constant 0 : index
    %c32_8 = arith.constant 32 : index
    %c0_9 = arith.constant 0 : index
    %7 = vector.load %arg13[%c0_7, %c32_8, %c0_9] : memref<2x48x128xbf16, #tpu.memory_space<vmem>>, vector<2x16x128xbf16>
    tpu.vector_store %arg13[%c0_7, %c32_8, %c0_9], %3 {strides = array<i32>} : memref<2x48x128xbf16, #tpu.memory_space<vmem>>, vector<2x16x128xbf16>,
    %c0_10 = arith.constant 0 : index
    %c0_11 = arith.constant 0 : index
    %c0_12 = arith.constant 0 : index
    %8 = vector.load %arg1[%c0_10, %c0_11, %c0_12] : memref<2x32x128xbf16, #tpu.memory_space<vmem>>, vector<1x16x128xbf16>
    %9 = vector.shape_cast %8 : vector<1x16x128xbf16> to vector<16x128xbf16>
    %c0_13 = arith.constant 0 : index
    %c0_14 = arith.constant 0 : index
    %c0_15 = arith.constant 0 : index
    %10 = vector.load %arg2[%c0_13, %c0_14, %c0_15] : memref<3x128x128xbf16, #tpu.memory_space<vmem>>, vector<1x128x128xbf16>
    %11 = vector.shape_cast %10 : vector<1x128x128xbf16> to vector<128x128xbf16>
    %cst_16 = arith.constant dense<0.000000e+00> : vector<16x128xf32>
    %12 = tpu.matmul %9, %11, %cst_16 {dimension_numbers = #tpu.dot_dimension_numbers<[1], [0], [0], [1], [0, 0, 1, 1], [], []>} : vector<16x128xbf16>, vector<128x128xbf16>, vector<16x128xf32> -> vector<16x128xf32>
    %c0_17 = arith.constant 0 : index
    %c1 = arith.constant 1 : index
    %c0_18 = arith.constant 0 : index
    %13 = vector.load %arg1[%c0_17, %c1, %c0_18] : memref<2x32x128xbf16, #tpu.memory_space<vmem>>, vector<1x16x128xbf16>
    %14 = vector.shape_cast %13 : vector<1x16x128xbf16> to vector<16x128xbf16>
    %c1_19 = arith.constant 1 : index
    %c0_20 = arith.constant 0 : index
    %c0_21 = arith.constant 0 : index
    %15 = vector.load %arg2[%c1_19, %c0_20, %c0_21] : memref<3x128x128xbf16, #tpu.memory_space<vmem>>, vector<1x128x128xbf16>
    %16 = vector.shape_cast %15 : vector<1x128x128xbf16> to vector<128x128xbf16>
    %cst_22 = arith.constant dense<0.000000e+00> : vector<16x128xf32>
    %17 = tpu.matmul %14, %16, %cst_22 {dimension_numbers = #tpu.dot_dimension_numbers<[1], [0], [0], [1], [0, 0, 1, 1], [], []>} : vector<16x128xbf16>, vector<128x128xbf16>, vector<16x128xf32> -> vector<16x128xf32>
    %18 = arith.addf %12, %17 : vector<16x128xf32>
    %c0_23 = arith.constant 0 : index
    %c2 = arith.constant 2 : index
    %c0_24 = arith.constant 0 : index
    %19 = vector.load %arg1[%c0_23, %c2, %c0_24] : memref<2x32x128xbf16, #tpu.memory_space<vmem>>, vector<1x16x128xbf16>
    %20 = vector.shape_cast %19 : vector<1x16x128xbf16> to vector<16x128xbf16>
    %c2_25 = arith.constant 2 : index
    %c0_26 = arith.constant 0 : index
    %c0_27 = arith.constant 0 : index
    %21 = vector.load %arg2[%c2_25, %c0_26, %c0_27] : memref<3x128x128xbf16, #tpu.memory_space<vmem>>, vector<1x128x128xbf16>
    %22 = vector.shape_cast %21 : vector<1x128x128xbf16> to vector<128x128xbf16>
    %cst_28 = arith.constant dense<0.000000e+00> : vector<16x128xf32>
    %23 = tpu.matmul %20, %22, %cst_28 {dimension_numbers = #tpu.dot_dimension_numbers<[1], [0], [0], [1], [0, 0, 1, 1], [], []>} : vector<16x128xbf16>, vector<128x128xbf16>, vector<16x128xf32> -> vector<16x128xf32>
    %24 = arith.addf %18, %23 : vector<16x128xf32>
    %c1_29 = arith.constant 1 : index
    %c0_30 = arith.constant 0 : index
    %c0_31 = arith.constant 0 : index
    %25 = vector.load %arg1[%c1_29, %c0_30, %c0_31] : memref<2x32x128xbf16, #tpu.memory_space<vmem>>, vector<1x16x128xbf16>
    %26 = vector.shape_cast %25 : vector<1x16x128xbf16> to vector<16x128xbf16>
    %c0_32 = arith.constant 0 : index
    %c0_33 = arith.constant 0 : index
    %c0_34 = arith.constant 0 : index
    %27 = vector.load %arg2[%c0_32, %c0_33, %c0_34] : memref<3x128x128xbf16, #tpu.memory_space<vmem>>, vector<1x128x128xbf16>
    %28 = vector.shape_cast %27 : vector<1x128x128xbf16> to vector<128x128xbf16>
    %cst_35 = arith.constant dense<0.000000e+00> : vector<16x128xf32>
    %29 = tpu.matmul %26, %28, %cst_35 {dimension_numbers = #tpu.dot_dimension_numbers<[1], [0], [0], [1], [0, 0, 1, 1], [], []>} : vector<16x128xbf16>, vector<128x128xbf16>, vector<16x128xf32> -> vector<16x128xf32>
    %c1_36 = arith.constant 1 : index
    %c1_37 = arith.constant 1 : index
    %c0_38 = arith.constant 0 : index
    %30 = vector.load %arg1[%c1_36, %c1_37, %c0_38] : memref<2x32x128xbf16, #tpu.memory_space<vmem>>, vector<1x16x128xbf16>
    %31 = vector.shape_cast %30 : vector<1x16x128xbf16> to vector<16x128xbf16>
    %c1_39 = arith.constant 1 : index
    %c0_40 = arith.constant 0 : index
    %c0_41 = arith.constant 0 : index
    %32 = vector.load %arg2[%c1_39, %c0_40, %c0_41] : memref<3x128x128xbf16, #tpu.memory_space<vmem>>, vector<1x128x128xbf16>
    %33 = vector.shape_cast %32 : vector<1x128x128xbf16> to vector<128x128xbf16>
    %cst_42 = arith.constant dense<0.000000e+00> : vector<16x128xf32>
    %34 = tpu.matmul %31, %33, %cst_42 {dimension_numbers = #tpu.dot_dimension_numbers<[1], [0], [0], [1], [0, 0, 1, 1], [], []>} : vector<16x128xbf16>, vector<128x128xbf16>, vector<16x128xf32> -> vector<16x128xf32>
    %35 = arith.addf %29, %34 : vector<16x128xf32>
    %c1_43 = arith.constant 1 : index
    %c2_44 = arith.constant 2 : index
    %c0_45 = arith.constant 0 : index
    %36 = vector.load %arg1[%c1_43, %c2_44, %c0_45] : memref<2x32x128xbf16, #tpu.memory_space<vmem>>, vector<1x16x128xbf16>
    %37 = vector.shape_cast %36 : vector<1x16x128xbf16> to vector<16x128xbf16>
    %c2_46 = arith.constant 2 : index
    %c0_47 = arith.constant 0 : index
    %c0_48 = arith.constant 0 : index
    %38 = vector.load %arg2[%c2_46, %c0_47, %c0_48] : memref<3x128x128xbf16, #tpu.memory_space<vmem>>, vector<1x128x128xbf16>
    %39 = vector.shape_cast %38 : vector<1x128x128xbf16> to vector<128x128xbf16>
    %cst_49 = arith.constant dense<0.000000e+00> : vector<16x128xf32>
    %40 = tpu.matmul %37, %39, %cst_49 {dimension_numbers = #tpu.dot_dimension_numbers<[1], [0], [0], [1], [0, 0, 1, 1], [], []>} : vector<16x128xbf16>, vector<128x128xbf16>, vector<16x128xf32> -> vector<16x128xf32>
    %41 = arith.addf %35, %40 : vector<16x128xf32>
    %cst_50 = arith.constant 0.000000e+00 : f32
    %42 = vector.broadcast %cst_50 : f32 to vector<1x128xf32>
    %cst_51 = arith.constant 0.000000e+00 : f32
    %43 = vector.shape_cast %2 : vector<16x1xi1> to vector<16x1xi1>
    %44 = vector.broadcast %43 : vector<16x1xi1> to vector<16x128xi1>
    %45 = vector.broadcast %cst_51 : f32 to vector<16x128xf32>
    %46 = arith.select %44, %24, %45 : vector<16x128xi1>, vector<16x128xf32>
    %cst_52 = arith.constant dense<0.000000e+00> : vector<128xf32>
    %47 = vector.multi_reduction <add>, %46, %cst_52 [0] : vector<16x128xf32> to vector<128xf32>
    %48 = vector.shape_cast %47 : vector<128xf32> to vector<1x128xf32>
    %49 = arith.addf %42, %48 : vector<1x128xf32>
    %cst_53 = arith.constant 0.000000e+00 : f32
    %50 = vector.shape_cast %2 : vector<16x1xi1> to vector<16x1xi1>
    %51 = vector.broadcast %50 : vector<16x1xi1> to vector<16x128xi1>
    %52 = vector.broadcast %cst_53 : f32 to vector<16x128xf32>
    %53 = arith.select %51, %41, %52 : vector<16x128xi1>, vector<16x128xf32>
    %cst_54 = arith.constant dense<0.000000e+00> : vector<128xf32>
    %54 = vector.multi_reduction <add>, %53, %cst_54 [0] : vector<16x128xf32> to vector<128xf32>
    %55 = vector.shape_cast %54 : vector<128xf32> to vector<1x128xf32>
    %56 = arith.addf %49, %55 : vector<1x128xf32>
    %cst_55 = arith.constant 0.0714285746 : f32
    %57 = vector.broadcast %cst_55 : f32 to vector<1x128xf32>
    %58 = arith.mulf %56, %57 : vector<1x128xf32>
    %cst_56 = arith.constant 0.000000e+00 : f32
    %59 = vector.broadcast %cst_56 : f32 to vector<1x128xf32>
    %60 = vector.broadcast %58 : vector<1x128xf32> to vector<16x128xf32>
    %61 = arith.subf %24, %60 : vector<16x128xf32>
    %62 = arith.mulf %61, %61 : vector<16x128xf32>
    %cst_57 = arith.constant 0.000000e+00 : f32
    %63 = vector.shape_cast %2 : vector<16x1xi1> to vector<16x1xi1>
    %64 = vector.broadcast %63 : vector<16x1xi1> to vector<16x128xi1>
    %65 = vector.broadcast %cst_57 : f32 to vector<16x128xf32>
    %66 = arith.select %64, %62, %65 : vector<16x128xi1>, vector<16x128xf32>
    %cst_58 = arith.constant dense<0.000000e+00> : vector<128xf32>
    %67 = vector.multi_reduction <add>, %66, %cst_58 [0] : vector<16x128xf32> to vector<128xf32>
    %68 = vector.shape_cast %67 : vector<128xf32> to vector<1x128xf32>
    %69 = arith.addf %59, %68 : vector<1x128xf32>
    %70 = vector.broadcast %58 : vector<1x128xf32> to vector<16x128xf32>
    %71 = arith.subf %41, %70 : vector<16x128xf32>
    %72 = arith.mulf %71, %71 : vector<16x128xf32>
    %cst_59 = arith.constant 0.000000e+00 : f32
    %73 = vector.shape_cast %2 : vector<16x1xi1> to vector<16x1xi1>
    %74 = vector.broadcast %73 : vector<16x1xi1> to vector<16x128xi1>
    %75 = vector.broadcast %cst_59 : f32 to vector<16x128xf32>
    %76 = arith.select %74, %72, %75 : vector<16x128xi1>, vector<16x128xf32>
    %cst_60 = arith.constant dense<0.000000e+00> : vector<128xf32>
    %77 = vector.multi_reduction <add>, %76, %cst_60 [0] : vector<16x128xf32> to vector<128xf32>
    %78 = vector.shape_cast %77 : vector<128xf32> to vector<1x128xf32>
    %79 = arith.addf %69, %78 : vector<1x128xf32>
    %cst_61 = arith.constant 0.0714285746 : f32
    %80 = vector.broadcast %cst_61 : f32 to vector<1x128xf32>
    %81 = arith.mulf %79, %80 : vector<1x128xf32>
    %cst_62 = arith.constant 9.99999974E-6 : f32
    %82 = vector.broadcast %cst_62 : f32 to vector<1x128xf32>
    %83 = arith.addf %81, %82 : vector<1x128xf32>
    %84 = math.rsqrt %83 : vector<1x128xf32>
    %c0_63 = arith.constant 0 : index
    %c0_64 = arith.constant 0 : index
    %85 = vector.load %arg3[%c0_63, %c0_64] : memref<1x128xf32, #tpu.memory_space<vmem>>, vector<1x128xf32>
    %86 = arith.mulf %84, %85 : vector<1x128xf32>
    %87 = vector.broadcast %58 : vector<1x128xf32> to vector<16x128xf32>
    %88 = arith.subf %24, %87 : vector<16x128xf32>
    %89 = vector.broadcast %86 : vector<1x128xf32> to vector<16x128xf32>
    %90 = arith.mulf %88, %89 : vector<16x128xf32>
    %c0_65 = arith.constant 0 : index
    %c0_66 = arith.constant 0 : index
    %91 = vector.load %arg4[%c0_65, %c0_66] : memref<1x128xf32, #tpu.memory_space<vmem>>, vector<1x128xf32>
    %92 = vector.broadcast %91 : vector<1x128xf32> to vector<16x128xf32>
    %93 = arith.addf %90, %92 : vector<16x128xf32>
    %cst_67 = arith.constant 0.000000e+00 : f32
    %94 = vector.broadcast %cst_67 : f32 to vector<16x128xf32>
    %95 = arith.maximumf %93, %94 : vector<16x128xf32>
    %cst_68 = arith.constant 0.000000e+00 : f32
    %96 = vector.shape_cast %2 : vector<16x1xi1> to vector<16x1xi1>
    %97 = vector.broadcast %96 : vector<16x1xi1> to vector<16x128xi1>
    %98 = vector.broadcast %cst_68 : f32 to vector<16x128xf32>
    %99 = arith.select %97, %95, %98 : vector<16x128xi1>, vector<16x128xf32>
    %100 = vector.broadcast %58 : vector<1x128xf32> to vector<16x128xf32>
    %101 = arith.subf %41, %100 : vector<16x128xf32>
    %102 = vector.broadcast %86 : vector<1x128xf32> to vector<16x128xf32>
    %103 = arith.mulf %101, %102 : vector<16x128xf32>
    %c0_69 = arith.constant 0 : index
    %c0_70 = arith.constant 0 : index
    %104 = vector.load %arg4[%c0_69, %c0_70] : memref<1x128xf32, #tpu.memory_space<vmem>>, vector<1x128xf32>
    %105 = vector.broadcast %104 : vector<1x128xf32> to vector<16x128xf32>
    %106 = arith.addf %103, %105 : vector<16x128xf32>
    %cst_71 = arith.constant 0.000000e+00 : f32
    %107 = vector.broadcast %cst_71 : f32 to vector<16x128xf32>
    %108 = arith.maximumf %106, %107 : vector<16x128xf32>
    %cst_72 = arith.constant 0.000000e+00 : f32
    %109 = vector.shape_cast %2 : vector<16x1xi1> to vector<16x1xi1>
    %110 = vector.broadcast %109 : vector<16x1xi1> to vector<16x128xi1>
    %111 = vector.broadcast %cst_72 : f32 to vector<16x128xf32>
    %112 = arith.select %110, %108, %111 : vector<16x128xi1>, vector<16x128xf32>
    %c0_73 = arith.constant 0 : index
    %c0_74 = arith.constant 0 : index
    %c0_75 = arith.constant 0 : index
    %113 = vector.load %arg14[%c0_73, %c0_74, %c0_75] : memref<2x16x128xf32, #tpu.memory_space<vmem>>, vector<1x16x128xf32>
    %114 = vector.shape_cast %113 : vector<1x16x128xf32> to vector<16x128xf32>
    %115 = vector.shape_cast %99 : vector<16x128xf32> to vector<1x16x128xf32>
    tpu.vector_store %arg14[%c0_73, %c0_74, %c0_75], %115 {strides = array<i32>} : memref<2x16x128xf32, #tpu.memory_space<vmem>>, vector<1x16x128xf32>,
    %116 = arith.truncf %99 : vector<16x128xf32> to vector<16x128xbf16>
    %c0_76 = arith.constant 0 : index
    %c16 = arith.constant 16 : index
    %c0_77 = arith.constant 0 : index
    %117 = vector.load %arg12[%c0_76, %c16, %c0_77] : memref<2x48x128xbf16, #tpu.memory_space<vmem>>, vector<1x16x128xbf16>
    %118 = vector.shape_cast %117 : vector<1x16x128xbf16> to vector<16x128xbf16>
    %119 = vector.shape_cast %116 : vector<16x128xbf16> to vector<1x16x128xbf16>
    tpu.vector_store %arg12[%c0_76, %c16, %c0_77], %119 {strides = array<i32>} : memref<2x48x128xbf16, #tpu.memory_space<vmem>>, vector<1x16x128xbf16>,
    %c1_78 = arith.constant 1 : index
    %c0_79 = arith.constant 0 : index
    %c0_80 = arith.constant 0 : index
    %120 = vector.load %arg14[%c1_78, %c0_79, %c0_80] : memref<2x16x128xf32, #tpu.memory_space<vmem>>, vector<1x16x128xf32>
    %121 = vector.shape_cast %120 : vector<1x16x128xf32> to vector<16x128xf32>
    %122 = vector.shape_cast %112 : vector<16x128xf32> to vector<1x16x128xf32>
    tpu.vector_store %arg14[%c1_78, %c0_79, %c0_80], %122 {strides = array<i32>} : memref<2x16x128xf32, #tpu.memory_space<vmem>>, vector<1x16x128xf32>,
    %123 = arith.truncf %112 : vector<16x128xf32> to vector<16x128xbf16>
    %c1_81 = arith.constant 1 : index
    %c16_82 = arith.constant 16 : index
    %c0_83 = arith.constant 0 : index
    %124 = vector.load %arg12[%c1_81, %c16_82, %c0_83] : memref<2x48x128xbf16, #tpu.memory_space<vmem>>, vector<1x16x128xbf16>
    %125 = vector.shape_cast %124 : vector<1x16x128xbf16> to vector<16x128xbf16>
    %126 = vector.shape_cast %123 : vector<16x128xbf16> to vector<1x16x128xbf16>
    tpu.vector_store %arg12[%c1_81, %c16_82, %c0_83], %126 {strides = array<i32>} : memref<2x48x128xbf16, #tpu.memory_space<vmem>>, vector<1x16x128xbf16>,
    %c0_84 = arith.constant 0 : index
    %c15 = arith.constant 15 : index
    %c0_85 = arith.constant 0 : index
    %127 = vector.load %arg12[%c0_84, %c15, %c0_85] : memref<2x48x128xbf16, #tpu.memory_space<vmem>>, vector<1x16x128xbf16>
    %128 = vector.shape_cast %127 : vector<1x16x128xbf16> to vector<16x128xbf16>
    %c0_86 = arith.constant 0 : index
    %c0_87 = arith.constant 0 : index
    %c0_88 = arith.constant 0 : index
    %129 = vector.load %arg5[%c0_86, %c0_87, %c0_88] : memref<3x128x128xbf16, #tpu.memory_space<vmem>>, vector<1x128x128xbf16>
    %130 = vector.shape_cast %129 : vector<1x128x128xbf16> to vector<128x128xbf16>
    %cst_89 = arith.constant dense<0.000000e+00> : vector<16x128xf32>
    %131 = tpu.matmul %128, %130, %cst_89 {dimension_numbers = #tpu.dot_dimension_numbers<[1], [0], [0], [1], [0, 0, 1, 1], [], []>} : vector<16x128xbf16>, vector<128x128xbf16>, vector<16x128xf32> -> vector<16x128xf32>
    %c0_90 = arith.constant 0 : index
    %c16_91 = arith.constant 16 : index
    %c0_92 = arith.constant 0 : index
    %132 = vector.load %arg12[%c0_90, %c16_91, %c0_92] : memref<2x48x128xbf16, #tpu.memory_space<vmem>>, vector<1x16x128xbf16>
    %133 = vector.shape_cast %132 : vector<1x16x128xbf16> to vector<16x128xbf16>
    %c1_93 = arith.constant 1 : index
    %c0_94 = arith.constant 0 : index
    %c0_95 = arith.constant 0 : index
    %134 = vector.load %arg5[%c1_93, %c0_94, %c0_95] : memref<3x128x128xbf16, #tpu.memory_space<vmem>>, vector<1x128x128xbf16>
    %135 = vector.shape_cast %134 : vector<1x128x128xbf16> to vector<128x128xbf16>
    %cst_96 = arith.constant dense<0.000000e+00> : vector<16x128xf32>
    %136 = tpu.matmul %133, %135, %cst_96 {dimension_numbers = #tpu.dot_dimension_numbers<[1], [0], [0], [1], [0, 0, 1, 1], [], []>} : vector<16x128xbf16>, vector<128x128xbf16>, vector<16x128xf32> -> vector<16x128xf32>
    %137 = arith.addf %131, %136 : vector<16x128xf32>
    %c0_97 = arith.constant 0 : index
    %c17 = arith.constant 17 : index
    %c0_98 = arith.constant 0 : index
    %138 = vector.load %arg12[%c0_97, %c17, %c0_98] : memref<2x48x128xbf16, #tpu.memory_space<vmem>>, vector<1x16x128xbf16>
    %139 = vector.shape_cast %138 : vector<1x16x128xbf16> to vector<16x128xbf16>
    %c2_99 = arith.constant 2 : index
    %c0_100 = arith.constant 0 : index
    %c0_101 = arith.constant 0 : index
    %140 = vector.load %arg5[%c2_99, %c0_100, %c0_101] : memref<3x128x128xbf16, #tpu.memory_space<vmem>>, vector<1x128x128xbf16>
    %141 = vector.shape_cast %140 : vector<1x128x128xbf16> to vector<128x128xbf16>
    %cst_102 = arith.constant dense<0.000000e+00> : vector<16x128xf32>
    %142 = tpu.matmul %139, %141, %cst_102 {dimension_numbers = #tpu.dot_dimension_numbers<[1], [0], [0], [1], [0, 0, 1, 1], [], []>} : vector<16x128xbf16>, vector<128x128xbf16>, vector<16x128xf32> -> vector<16x128xf32>
    %143 = arith.addf %137, %142 : vector<16x128xf32>
    %c1_103 = arith.constant 1 : index
    %c15_104 = arith.constant 15 : index
    %c0_105 = arith.constant 0 : index
    %144 = vector.load %arg12[%c1_103, %c15_104, %c0_105] : memref<2x48x128xbf16, #tpu.memory_space<vmem>>, vector<1x16x128xbf16>
    %145 = vector.shape_cast %144 : vector<1x16x128xbf16> to vector<16x128xbf16>
    %c0_106 = arith.constant 0 : index
    %c0_107 = arith.constant 0 : index
    %c0_108 = arith.constant 0 : index
    %146 = vector.load %arg5[%c0_106, %c0_107, %c0_108] : memref<3x128x128xbf16, #tpu.memory_space<vmem>>, vector<1x128x128xbf16>
    %147 = vector.shape_cast %146 : vector<1x128x128xbf16> to vector<128x128xbf16>
    %cst_109 = arith.constant dense<0.000000e+00> : vector<16x128xf32>
    %148 = tpu.matmul %145, %147, %cst_109 {dimension_numbers = #tpu.dot_dimension_numbers<[1], [0], [0], [1], [0, 0, 1, 1], [], []>} : vector<16x128xbf16>, vector<128x128xbf16>, vector<16x128xf32> -> vector<16x128xf32>
    %c1_110 = arith.constant 1 : index
    %c16_111 = arith.constant 16 : index
    %c0_112 = arith.constant 0 : index
    %149 = vector.load %arg12[%c1_110, %c16_111, %c0_112] : memref<2x48x128xbf16, #tpu.memory_space<vmem>>, vector<1x16x128xbf16>
    %150 = vector.shape_cast %149 : vector<1x16x128xbf16> to vector<16x128xbf16>
    %c1_113 = arith.constant 1 : index
    %c0_114 = arith.constant 0 : index
    %c0_115 = arith.constant 0 : index
    %151 = vector.load %arg5[%c1_113, %c0_114, %c0_115] : memref<3x128x128xbf16, #tpu.memory_space<vmem>>, vector<1x128x128xbf16>
    %152 = vector.shape_cast %151 : vector<1x128x128xbf16> to vector<128x128xbf16>
    %cst_116 = arith.constant dense<0.000000e+00> : vector<16x128xf32>
    %153 = tpu.matmul %150, %152, %cst_116 {dimension_numbers = #tpu.dot_dimension_numbers<[1], [0], [0], [1], [0, 0, 1, 1], [], []>} : vector<16x128xbf16>, vector<128x128xbf16>, vector<16x128xf32> -> vector<16x128xf32>
    %154 = arith.addf %148, %153 : vector<16x128xf32>
    %c1_117 = arith.constant 1 : index
    %c17_118 = arith.constant 17 : index
    %c0_119 = arith.constant 0 : index
    %155 = vector.load %arg12[%c1_117, %c17_118, %c0_119] : memref<2x48x128xbf16, #tpu.memory_space<vmem>>, vector<1x16x128xbf16>
    %156 = vector.shape_cast %155 : vector<1x16x128xbf16> to vector<16x128xbf16>
    %c2_120 = arith.constant 2 : index
    %c0_121 = arith.constant 0 : index
    %c0_122 = arith.constant 0 : index
    %157 = vector.load %arg5[%c2_120, %c0_121, %c0_122] : memref<3x128x128xbf16, #tpu.memory_space<vmem>>, vector<1x128x128xbf16>
    %158 = vector.shape_cast %157 : vector<1x128x128xbf16> to vector<128x128xbf16>
    %cst_123 = arith.constant dense<0.000000e+00> : vector<16x128xf32>
    %159 = tpu.matmul %156, %158, %cst_123 {dimension_numbers = #tpu.dot_dimension_numbers<[1], [0], [0], [1], [0, 0, 1, 1], [], []>} : vector<16x128xbf16>, vector<128x128xbf16>, vector<16x128xf32> -> vector<16x128xf32>
    %160 = arith.addf %154, %159 : vector<16x128xf32>
    %cst_124 = arith.constant 0.000000e+00 : f32
    %161 = vector.broadcast %cst_124 : f32 to vector<1x128xf32>
    %cst_125 = arith.constant 0.000000e+00 : f32
    %162 = vector.shape_cast %2 : vector<16x1xi1> to vector<16x1xi1>
    %163 = vector.broadcast %162 : vector<16x1xi1> to vector<16x128xi1>
    %164 = vector.broadcast %cst_125 : f32 to vector<16x128xf32>
    %165 = arith.select %163, %143, %164 : vector<16x128xi1>, vector<16x128xf32>
    %cst_126 = arith.constant dense<0.000000e+00> : vector<128xf32>
    %166 = vector.multi_reduction <add>, %165, %cst_126 [0] : vector<16x128xf32> to vector<128xf32>
    %167 = vector.shape_cast %166 : vector<128xf32> to vector<1x128xf32>
    %168 = arith.addf %161, %167 : vector<1x128xf32>
    %cst_127 = arith.constant 0.000000e+00 : f32
    %169 = vector.shape_cast %2 : vector<16x1xi1> to vector<16x1xi1>
    %170 = vector.broadcast %169 : vector<16x1xi1> to vector<16x128xi1>
    %171 = vector.broadcast %cst_127 : f32 to vector<16x128xf32>
    %172 = arith.select %170, %160, %171 : vector<16x128xi1>, vector<16x128xf32>
    %cst_128 = arith.constant dense<0.000000e+00> : vector<128xf32>
    %173 = vector.multi_reduction <add>, %172, %cst_128 [0] : vector<16x128xf32> to vector<128xf32>
    %174 = vector.shape_cast %173 : vector<128xf32> to vector<1x128xf32>
    %175 = arith.addf %168, %174 : vector<1x128xf32>
    %cst_129 = arith.constant 0.0714285746 : f32
    %176 = vector.broadcast %cst_129 : f32 to vector<1x128xf32>
    %177 = arith.mulf %175, %176 : vector<1x128xf32>
    %cst_130 = arith.constant 0.000000e+00 : f32
    %178 = vector.broadcast %cst_130 : f32 to vector<1x128xf32>
    %179 = vector.broadcast %177 : vector<1x128xf32> to vector<16x128xf32>
    %180 = arith.subf %143, %179 : vector<16x128xf32>
    %181 = arith.mulf %180, %180 : vector<16x128xf32>
    %cst_131 = arith.constant 0.000000e+00 : f32
    %182 = vector.shape_cast %2 : vector<16x1xi1> to vector<16x1xi1>
    %183 = vector.broadcast %182 : vector<16x1xi1> to vector<16x128xi1>
    %184 = vector.broadcast %cst_131 : f32 to vector<16x128xf32>
    %185 = arith.select %183, %181, %184 : vector<16x128xi1>, vector<16x128xf32>
    %cst_132 = arith.constant dense<0.000000e+00> : vector<128xf32>
    %186 = vector.multi_reduction <add>, %185, %cst_132 [0] : vector<16x128xf32> to vector<128xf32>
    %187 = vector.shape_cast %186 : vector<128xf32> to vector<1x128xf32>
    %188 = arith.addf %178, %187 : vector<1x128xf32>
    %189 = vector.broadcast %177 : vector<1x128xf32> to vector<16x128xf32>
    %190 = arith.subf %160, %189 : vector<16x128xf32>
    %191 = arith.mulf %190, %190 : vector<16x128xf32>
    %cst_133 = arith.constant 0.000000e+00 : f32
    %192 = vector.shape_cast %2 : vector<16x1xi1> to vector<16x1xi1>
    %193 = vector.broadcast %192 : vector<16x1xi1> to vector<16x128xi1>
    %194 = vector.broadcast %cst_133 : f32 to vector<16x128xf32>
    %195 = arith.select %193, %191, %194 : vector<16x128xi1>, vector<16x128xf32>
    %cst_134 = arith.constant dense<0.000000e+00> : vector<128xf32>
    %196 = vector.multi_reduction <add>, %195, %cst_134 [0] : vector<16x128xf32> to vector<128xf32>
    %197 = vector.shape_cast %196 : vector<128xf32> to vector<1x128xf32>
    %198 = arith.addf %188, %197 : vector<1x128xf32>
    %cst_135 = arith.constant 0.0714285746 : f32
    %199 = vector.broadcast %cst_135 : f32 to vector<1x128xf32>
    %200 = arith.mulf %198, %199 : vector<1x128xf32>
    %cst_136 = arith.constant 9.99999974E-6 : f32
    %201 = vector.broadcast %cst_136 : f32 to vector<1x128xf32>
    %202 = arith.addf %200, %201 : vector<1x128xf32>
    %203 = math.rsqrt %202 : vector<1x128xf32>
    %c0_137 = arith.constant 0 : index
    %c0_138 = arith.constant 0 : index
    %204 = vector.load %arg6[%c0_137, %c0_138] : memref<1x128xf32, #tpu.memory_space<vmem>>, vector<1x128xf32>
    %205 = arith.mulf %203, %204 : vector<1x128xf32>
    %206 = vector.broadcast %177 : vector<1x128xf32> to vector<16x128xf32>
    %207 = arith.subf %143, %206 : vector<16x128xf32>
    %208 = vector.broadcast %205 : vector<1x128xf32> to vector<16x128xf32>
    %209 = arith.mulf %207, %208 : vector<16x128xf32>
    %c0_139 = arith.constant 0 : index
    %c0_140 = arith.constant 0 : index
    %210 = vector.load %arg7[%c0_139, %c0_140] : memref<1x128xf32, #tpu.memory_space<vmem>>, vector<1x128xf32>
    %211 = vector.broadcast %210 : vector<1x128xf32> to vector<16x128xf32>
    %212 = arith.addf %209, %211 : vector<16x128xf32>
    %cst_141 = arith.constant 0.000000e+00 : f32
    %213 = vector.broadcast %cst_141 : f32 to vector<16x128xf32>
    %214 = arith.maximumf %212, %213 : vector<16x128xf32>
    %cst_142 = arith.constant 0.000000e+00 : f32
    %215 = vector.shape_cast %2 : vector<16x1xi1> to vector<16x1xi1>
    %216 = vector.broadcast %215 : vector<16x1xi1> to vector<16x128xi1>
    %217 = vector.broadcast %cst_142 : f32 to vector<16x128xf32>
    %218 = arith.select %216, %214, %217 : vector<16x128xi1>, vector<16x128xf32>
    %219 = vector.broadcast %177 : vector<1x128xf32> to vector<16x128xf32>
    %220 = arith.subf %160, %219 : vector<16x128xf32>
    %221 = vector.broadcast %205 : vector<1x128xf32> to vector<16x128xf32>
    %222 = arith.mulf %220, %221 : vector<16x128xf32>
    %c0_143 = arith.constant 0 : index
    %c0_144 = arith.constant 0 : index
    %223 = vector.load %arg7[%c0_143, %c0_144] : memref<1x128xf32, #tpu.memory_space<vmem>>, vector<1x128xf32>
    %224 = vector.broadcast %223 : vector<1x128xf32> to vector<16x128xf32>
    %225 = arith.addf %222, %224 : vector<16x128xf32>
    %cst_145 = arith.constant 0.000000e+00 : f32
    %226 = vector.broadcast %cst_145 : f32 to vector<16x128xf32>
    %227 = arith.maximumf %225, %226 : vector<16x128xf32>
    %cst_146 = arith.constant 0.000000e+00 : f32
    %228 = vector.shape_cast %2 : vector<16x1xi1> to vector<16x1xi1>
    %229 = vector.broadcast %228 : vector<16x1xi1> to vector<16x128xi1>
    %230 = vector.broadcast %cst_146 : f32 to vector<16x128xf32>
    %231 = arith.select %229, %227, %230 : vector<16x128xi1>, vector<16x128xf32>
    %232 = arith.truncf %218 : vector<16x128xf32> to vector<16x128xbf16>
    %c0_147 = arith.constant 0 : index
    %c16_148 = arith.constant 16 : index
    %c0_149 = arith.constant 0 : index
    %233 = vector.load %arg13[%c0_147, %c16_148, %c0_149] : memref<2x48x128xbf16, #tpu.memory_space<vmem>>, vector<1x16x128xbf16>
    %234 = vector.shape_cast %233 : vector<1x16x128xbf16> to vector<16x128xbf16>
    %235 = vector.shape_cast %232 : vector<16x128xbf16> to vector<1x16x128xbf16>
    tpu.vector_store %arg13[%c0_147, %c16_148, %c0_149], %235 {strides = array<i32>} : memref<2x48x128xbf16, #tpu.memory_space<vmem>>, vector<1x16x128xbf16>,
    %236 = arith.truncf %231 : vector<16x128xf32> to vector<16x128xbf16>
    %c1_150 = arith.constant 1 : index
    %c16_151 = arith.constant 16 : index
    %c0_152 = arith.constant 0 : index
    %237 = vector.load %arg13[%c1_150, %c16_151, %c0_152] : memref<2x48x128xbf16, #tpu.memory_space<vmem>>, vector<1x16x128xbf16>
    %238 = vector.shape_cast %237 : vector<1x16x128xbf16> to vector<16x128xbf16>
    %239 = vector.shape_cast %236 : vector<16x128xbf16> to vector<1x16x128xbf16>
    tpu.vector_store %arg13[%c1_150, %c16_151, %c0_152], %239 {strides = array<i32>} : memref<2x48x128xbf16, #tpu.memory_space<vmem>>, vector<1x16x128xbf16>,
    %c0_153 = arith.constant 0 : index
    %c15_154 = arith.constant 15 : index
    %c0_155 = arith.constant 0 : index
    %240 = vector.load %arg13[%c0_153, %c15_154, %c0_155] : memref<2x48x128xbf16, #tpu.memory_space<vmem>>, vector<1x16x128xbf16>
    %241 = vector.shape_cast %240 : vector<1x16x128xbf16> to vector<16x128xbf16>
    %c0_156 = arith.constant 0 : index
    %c0_157 = arith.constant 0 : index
    %c0_158 = arith.constant 0 : index
    %242 = vector.load %arg8[%c0_156, %c0_157, %c0_158] : memref<3x128x128xbf16, #tpu.memory_space<vmem>>, vector<1x128x128xbf16>
    %243 = vector.shape_cast %242 : vector<1x128x128xbf16> to vector<128x128xbf16>
    %cst_159 = arith.constant dense<0.000000e+00> : vector<16x128xf32>
    %244 = tpu.matmul %241, %243, %cst_159 {dimension_numbers = #tpu.dot_dimension_numbers<[1], [0], [0], [1], [0, 0, 1, 1], [], []>} : vector<16x128xbf16>, vector<128x128xbf16>, vector<16x128xf32> -> vector<16x128xf32>
    %c0_160 = arith.constant 0 : index
    %c16_161 = arith.constant 16 : index
    %c0_162 = arith.constant 0 : index
    %245 = vector.load %arg13[%c0_160, %c16_161, %c0_162] : memref<2x48x128xbf16, #tpu.memory_space<vmem>>, vector<1x16x128xbf16>
    %246 = vector.shape_cast %245 : vector<1x16x128xbf16> to vector<16x128xbf16>
    %c1_163 = arith.constant 1 : index
    %c0_164 = arith.constant 0 : index
    %c0_165 = arith.constant 0 : index
    %247 = vector.load %arg8[%c1_163, %c0_164, %c0_165] : memref<3x128x128xbf16, #tpu.memory_space<vmem>>, vector<1x128x128xbf16>
    %248 = vector.shape_cast %247 : vector<1x128x128xbf16> to vector<128x128xbf16>
    %cst_166 = arith.constant dense<0.000000e+00> : vector<16x128xf32>
    %249 = tpu.matmul %246, %248, %cst_166 {dimension_numbers = #tpu.dot_dimension_numbers<[1], [0], [0], [1], [0, 0, 1, 1], [], []>} : vector<16x128xbf16>, vector<128x128xbf16>, vector<16x128xf32> -> vector<16x128xf32>
    %250 = arith.addf %244, %249 : vector<16x128xf32>
    %c0_167 = arith.constant 0 : index
    %c17_168 = arith.constant 17 : index
    %c0_169 = arith.constant 0 : index
    %251 = vector.load %arg13[%c0_167, %c17_168, %c0_169] : memref<2x48x128xbf16, #tpu.memory_space<vmem>>, vector<1x16x128xbf16>
    %252 = vector.shape_cast %251 : vector<1x16x128xbf16> to vector<16x128xbf16>
    %c2_170 = arith.constant 2 : index
    %c0_171 = arith.constant 0 : index
    %c0_172 = arith.constant 0 : index
    %253 = vector.load %arg8[%c2_170, %c0_171, %c0_172] : memref<3x128x128xbf16, #tpu.memory_space<vmem>>, vector<1x128x128xbf16>
    %254 = vector.shape_cast %253 : vector<1x128x128xbf16> to vector<128x128xbf16>
    %cst_173 = arith.constant dense<0.000000e+00> : vector<16x128xf32>
    %255 = tpu.matmul %252, %254, %cst_173 {dimension_numbers = #tpu.dot_dimension_numbers<[1], [0], [0], [1], [0, 0, 1, 1], [], []>} : vector<16x128xbf16>, vector<128x128xbf16>, vector<16x128xf32> -> vector<16x128xf32>
    %256 = arith.addf %250, %255 : vector<16x128xf32>
    %c1_174 = arith.constant 1 : index
    %c15_175 = arith.constant 15 : index
    %c0_176 = arith.constant 0 : index
    %257 = vector.load %arg13[%c1_174, %c15_175, %c0_176] : memref<2x48x128xbf16, #tpu.memory_space<vmem>>, vector<1x16x128xbf16>
    %258 = vector.shape_cast %257 : vector<1x16x128xbf16> to vector<16x128xbf16>
    %c0_177 = arith.constant 0 : index
    %c0_178 = arith.constant 0 : index
    %c0_179 = arith.constant 0 : index
    %259 = vector.load %arg8[%c0_177, %c0_178, %c0_179] : memref<3x128x128xbf16, #tpu.memory_space<vmem>>, vector<1x128x128xbf16>
    %260 = vector.shape_cast %259 : vector<1x128x128xbf16> to vector<128x128xbf16>
    %cst_180 = arith.constant dense<0.000000e+00> : vector<16x128xf32>
    %261 = tpu.matmul %258, %260, %cst_180 {dimension_numbers = #tpu.dot_dimension_numbers<[1], [0], [0], [1], [0, 0, 1, 1], [], []>} : vector<16x128xbf16>, vector<128x128xbf16>, vector<16x128xf32> -> vector<16x128xf32>
    %c1_181 = arith.constant 1 : index
    %c16_182 = arith.constant 16 : index
    %c0_183 = arith.constant 0 : index
    %262 = vector.load %arg13[%c1_181, %c16_182, %c0_183] : memref<2x48x128xbf16, #tpu.memory_space<vmem>>, vector<1x16x128xbf16>
    %263 = vector.shape_cast %262 : vector<1x16x128xbf16> to vector<16x128xbf16>
    %c1_184 = arith.constant 1 : index
    %c0_185 = arith.constant 0 : index
    %c0_186 = arith.constant 0 : index
    %264 = vector.load %arg8[%c1_184, %c0_185, %c0_186] : memref<3x128x128xbf16, #tpu.memory_space<vmem>>, vector<1x128x128xbf16>
    %265 = vector.shape_cast %264 : vector<1x128x128xbf16> to vector<128x128xbf16>
    %cst_187 = arith.constant dense<0.000000e+00> : vector<16x128xf32>
    %266 = tpu.matmul %263, %265, %cst_187 {dimension_numbers = #tpu.dot_dimension_numbers<[1], [0], [0], [1], [0, 0, 1, 1], [], []>} : vector<16x128xbf16>, vector<128x128xbf16>, vector<16x128xf32> -> vector<16x128xf32>
    %267 = arith.addf %261, %266 : vector<16x128xf32>
    %c1_188 = arith.constant 1 : index
    %c17_189 = arith.constant 17 : index
    %c0_190 = arith.constant 0 : index
    %268 = vector.load %arg13[%c1_188, %c17_189, %c0_190] : memref<2x48x128xbf16, #tpu.memory_space<vmem>>, vector<1x16x128xbf16>
    %269 = vector.shape_cast %268 : vector<1x16x128xbf16> to vector<16x128xbf16>
    %c2_191 = arith.constant 2 : index
    %c0_192 = arith.constant 0 : index
    %c0_193 = arith.constant 0 : index
    %270 = vector.load %arg8[%c2_191, %c0_192, %c0_193] : memref<3x128x128xbf16, #tpu.memory_space<vmem>>, vector<1x128x128xbf16>
    %271 = vector.shape_cast %270 : vector<1x128x128xbf16> to vector<128x128xbf16>
    %cst_194 = arith.constant dense<0.000000e+00> : vector<16x128xf32>
    %272 = tpu.matmul %269, %271, %cst_194 {dimension_numbers = #tpu.dot_dimension_numbers<[1], [0], [0], [1], [0, 0, 1, 1], [], []>} : vector<16x128xbf16>, vector<128x128xbf16>, vector<16x128xf32> -> vector<16x128xf32>
    %273 = arith.addf %267, %272 : vector<16x128xf32>
    %cst_195 = arith.constant 0.000000e+00 : f32
    %274 = vector.broadcast %cst_195 : f32 to vector<1x128xf32>
    %cst_196 = arith.constant 0.000000e+00 : f32
    %275 = vector.shape_cast %2 : vector<16x1xi1> to vector<16x1xi1>
    %276 = vector.broadcast %275 : vector<16x1xi1> to vector<16x128xi1>
    %277 = vector.broadcast %cst_196 : f32 to vector<16x128xf32>
    %278 = arith.select %276, %256, %277 : vector<16x128xi1>, vector<16x128xf32>
    %cst_197 = arith.constant dense<0.000000e+00> : vector<128xf32>
    %279 = vector.multi_reduction <add>, %278, %cst_197 [0] : vector<16x128xf32> to vector<128xf32>
    %280 = vector.shape_cast %279 : vector<128xf32> to vector<1x128xf32>
    %281 = arith.addf %274, %280 : vector<1x128xf32>
    %cst_198 = arith.constant 0.000000e+00 : f32
    %282 = vector.shape_cast %2 : vector<16x1xi1> to vector<16x1xi1>
    %283 = vector.broadcast %282 : vector<16x1xi1> to vector<16x128xi1>
    %284 = vector.broadcast %cst_198 : f32 to vector<16x128xf32>
    %285 = arith.select %283, %273, %284 : vector<16x128xi1>, vector<16x128xf32>
    %cst_199 = arith.constant dense<0.000000e+00> : vector<128xf32>
    %286 = vector.multi_reduction <add>, %285, %cst_199 [0] : vector<16x128xf32> to vector<128xf32>
    %287 = vector.shape_cast %286 : vector<128xf32> to vector<1x128xf32>
    %288 = arith.addf %281, %287 : vector<1x128xf32>
    %cst_200 = arith.constant 0.0714285746 : f32
    %289 = vector.broadcast %cst_200 : f32 to vector<1x128xf32>
    %290 = arith.mulf %288, %289 : vector<1x128xf32>
    %cst_201 = arith.constant 0.000000e+00 : f32
    %291 = vector.broadcast %cst_201 : f32 to vector<1x128xf32>
    %292 = vector.broadcast %290 : vector<1x128xf32> to vector<16x128xf32>
    %293 = arith.subf %256, %292 : vector<16x128xf32>
    %294 = arith.mulf %293, %293 : vector<16x128xf32>
    %cst_202 = arith.constant 0.000000e+00 : f32
    %295 = vector.shape_cast %2 : vector<16x1xi1> to vector<16x1xi1>
    %296 = vector.broadcast %295 : vector<16x1xi1> to vector<16x128xi1>
    %297 = vector.broadcast %cst_202 : f32 to vector<16x128xf32>
    %298 = arith.select %296, %294, %297 : vector<16x128xi1>, vector<16x128xf32>
    %cst_203 = arith.constant dense<0.000000e+00> : vector<128xf32>
    %299 = vector.multi_reduction <add>, %298, %cst_203 [0] : vector<16x128xf32> to vector<128xf32>
    %300 = vector.shape_cast %299 : vector<128xf32> to vector<1x128xf32>
    %301 = arith.addf %291, %300 : vector<1x128xf32>
    %302 = vector.broadcast %290 : vector<1x128xf32> to vector<16x128xf32>
    %303 = arith.subf %273, %302 : vector<16x128xf32>
    %304 = arith.mulf %303, %303 : vector<16x128xf32>
    %cst_204 = arith.constant 0.000000e+00 : f32
    %305 = vector.shape_cast %2 : vector<16x1xi1> to vector<16x1xi1>
    %306 = vector.broadcast %305 : vector<16x1xi1> to vector<16x128xi1>
    %307 = vector.broadcast %cst_204 : f32 to vector<16x128xf32>
    %308 = arith.select %306, %304, %307 : vector<16x128xi1>, vector<16x128xf32>
    %cst_205 = arith.constant dense<0.000000e+00> : vector<128xf32>
    %309 = vector.multi_reduction <add>, %308, %cst_205 [0] : vector<16x128xf32> to vector<128xf32>
    %310 = vector.shape_cast %309 : vector<128xf32> to vector<1x128xf32>
    %311 = arith.addf %301, %310 : vector<1x128xf32>
    %cst_206 = arith.constant 0.0714285746 : f32
    %312 = vector.broadcast %cst_206 : f32 to vector<1x128xf32>
    %313 = arith.mulf %311, %312 : vector<1x128xf32>
    %cst_207 = arith.constant 9.99999974E-6 : f32
    %314 = vector.broadcast %cst_207 : f32 to vector<1x128xf32>
    %315 = arith.addf %313, %314 : vector<1x128xf32>
    %316 = math.rsqrt %315 : vector<1x128xf32>
    %c0_208 = arith.constant 0 : index
    %c0_209 = arith.constant 0 : index
    %317 = vector.load %arg9[%c0_208, %c0_209] : memref<1x128xf32, #tpu.memory_space<vmem>>, vector<1x128xf32>
    %318 = arith.mulf %316, %317 : vector<1x128xf32>
    %319 = vector.broadcast %290 : vector<1x128xf32> to vector<16x128xf32>
    %320 = arith.subf %256, %319 : vector<16x128xf32>
    %321 = vector.broadcast %318 : vector<1x128xf32> to vector<16x128xf32>
    %322 = arith.mulf %320, %321 : vector<16x128xf32>
    %c0_210 = arith.constant 0 : index
    %c0_211 = arith.constant 0 : index
    %323 = vector.load %arg10[%c0_210, %c0_211] : memref<1x128xf32, #tpu.memory_space<vmem>>, vector<1x128xf32>
    %324 = vector.broadcast %323 : vector<1x128xf32> to vector<16x128xf32>
    %325 = arith.addf %322, %324 : vector<16x128xf32>
    %cst_212 = arith.constant 0.000000e+00 : f32
    %326 = vector.shape_cast %2 : vector<16x1xi1> to vector<16x1xi1>
    %327 = vector.broadcast %326 : vector<16x1xi1> to vector<16x128xi1>
    %328 = vector.broadcast %cst_212 : f32 to vector<16x128xf32>
    %329 = arith.select %327, %325, %328 : vector<16x128xi1>, vector<16x128xf32>
    %330 = vector.broadcast %290 : vector<1x128xf32> to vector<16x128xf32>
    %331 = arith.subf %273, %330 : vector<16x128xf32>
    %332 = vector.broadcast %318 : vector<1x128xf32> to vector<16x128xf32>
    %333 = arith.mulf %331, %332 : vector<16x128xf32>
    %c0_213 = arith.constant 0 : index
    %c0_214 = arith.constant 0 : index
    %334 = vector.load %arg10[%c0_213, %c0_214] : memref<1x128xf32, #tpu.memory_space<vmem>>, vector<1x128xf32>
    %335 = vector.broadcast %334 : vector<1x128xf32> to vector<16x128xf32>
    %336 = arith.addf %333, %335 : vector<16x128xf32>
    %cst_215 = arith.constant 0.000000e+00 : f32
    %337 = vector.shape_cast %2 : vector<16x1xi1> to vector<16x1xi1>
    %338 = vector.broadcast %337 : vector<16x1xi1> to vector<16x128xi1>
    %339 = vector.broadcast %cst_215 : f32 to vector<16x128xf32>
    %340 = arith.select %338, %336, %339 : vector<16x128xi1>, vector<16x128xf32>
    %c0_216 = arith.constant 0 : index
    %c0_217 = arith.constant 0 : index
    %c0_218 = arith.constant 0 : index
    %341 = vector.load %arg14[%c0_216, %c0_217, %c0_218] : memref<2x16x128xf32, #tpu.memory_space<vmem>>, vector<1x16x128xf32>
    %342 = vector.shape_cast %341 : vector<1x16x128xf32> to vector<16x128xf32>
    %343 = arith.addf %329, %342 : vector<16x128xf32>
    %cst_219 = arith.constant 0.000000e+00 : f32
    %344 = vector.broadcast %cst_219 : f32 to vector<16x128xf32>
    %345 = arith.maximumf %343, %344 : vector<16x128xf32>
    %c0_220 = arith.constant 0 : index
    %c0_221 = arith.constant 0 : index
    %c0_222 = arith.constant 0 : index
    %346 = vector.load %arg11[%c0_220, %c0_221, %c0_222] : memref<2x16x128xf32, #tpu.memory_space<vmem>>, vector<1x16x128xf32>
    %347 = vector.shape_cast %346 : vector<1x16x128xf32> to vector<16x128xf32>
    %348 = vector.shape_cast %345 : vector<16x128xf32> to vector<1x16x128xf32>
    tpu.vector_store %arg11[%c0_220, %c0_221, %c0_222], %348 {strides = array<i32>} : memref<2x16x128xf32, #tpu.memory_space<vmem>>, vector<1x16x128xf32>,
    %c1_223 = arith.constant 1 : index
    %c0_224 = arith.constant 0 : index
    %c0_225 = arith.constant 0 : index
    %349 = vector.load %arg14[%c1_223, %c0_224, %c0_225] : memref<2x16x128xf32, #tpu.memory_space<vmem>>, vector<1x16x128xf32>
    %350 = vector.shape_cast %349 : vector<1x16x128xf32> to vector<16x128xf32>
    %351 = arith.addf %340, %350 : vector<16x128xf32>
    %cst_226 = arith.constant 0.000000e+00 : f32
    %352 = vector.broadcast %cst_226 : f32 to vector<16x128xf32>
    %353 = arith.maximumf %351, %352 : vector<16x128xf32>
    %c1_227 = arith.constant 1 : index
    %c0_228 = arith.constant 0 : index
    %c0_229 = arith.constant 0 : index
    %354 = vector.load %arg11[%c1_227, %c0_228, %c0_229] : memref<2x16x128xf32, #tpu.memory_space<vmem>>, vector<1x16x128xf32>
    %355 = vector.shape_cast %354 : vector<1x16x128xf32> to vector<16x128xf32>
    %356 = vector.shape_cast %353 : vector<16x128xf32> to vector<1x16x128xf32>
    tpu.vector_store %arg11[%c1_227, %c0_228, %c0_229], %356 {strides = array<i32>} : memref<2x16x128xf32, #tpu.memory_space<vmem>>, vector<1x16x128xf32>,
    return
  }
  func.func @transform_0(%arg0: i32) -> (i32, i32, i32) {
    %c0_i32 = arith.constant 0 : i32
    %c0_i32_0 = arith.constant 0 : i32
    %c0_i32_1 = arith.constant 0 : i32
    %c0_i32_2 = arith.constant 0 : i32
    return %c0_i32, %c0_i32_0, %c0_i32_1 : i32, i32, i32
  }
  func.func @transform_1(%arg0: i32) -> (i32, i32, i32) {
    %c0_i32 = arith.constant 0 : i32
    %c0_i32_0 = arith.constant 0 : i32
    %c0_i32_1 = arith.constant 0 : i32
    %c0_i32_2 = arith.constant 0 : i32
    return %c0_i32, %c0_i32_0, %c0_i32_1 : i32, i32, i32
  }
  func.func @transform_2(%arg0: i32) -> (i32, i32) {
    %c0_i32 = arith.constant 0 : i32
    %c0_i32_0 = arith.constant 0 : i32
    %c0_i32_1 = arith.constant 0 : i32
    return %c0_i32, %c0_i32_0 : i32, i32
  }
  func.func @transform_3(%arg0: i32) -> (i32, i32) {
    %c0_i32 = arith.constant 0 : i32
    %c0_i32_0 = arith.constant 0 : i32
    %c0_i32_1 = arith.constant 0 : i32
    return %c0_i32, %c0_i32_0 : i32, i32
  }
  func.func @transform_4(%arg0: i32) -> (i32, i32, i32) {
    %c0_i32 = arith.constant 0 : i32
    %c0_i32_0 = arith.constant 0 : i32
    %c0_i32_1 = arith.constant 0 : i32
    %c0_i32_2 = arith.constant 0 : i32
    return %c0_i32, %c0_i32_0, %c0_i32_1 : i32, i32, i32
  }
  func.func @transform_5(%arg0: i32) -> (i32, i32) {
    %c0_i32 = arith.constant 0 : i32
    %c0_i32_0 = arith.constant 0 : i32
    %c0_i32_1 = arith.constant 0 : i32
    return %c0_i32, %c0_i32_0 : i32, i32
  }
  func.func @transform_6(%arg0: i32) -> (i32, i32) {
    %c0_i32 = arith.constant 0 : i32
    %c0_i32_0 = arith.constant 0 : i32
    %c0_i32_1 = arith.constant 0 : i32
    return %c0_i32, %c0_i32_0 : i32, i32
  }
  func.func @transform_7(%arg0: i32) -> (i32, i32, i32) {
    %c0_i32 = arith.constant 0 : i32
    %c0_i32_0 = arith.constant 0 : i32
    %c0_i32_1 = arith.constant 0 : i32
    %c0_i32_2 = arith.constant 0 : i32
    return %c0_i32, %c0_i32_0, %c0_i32_1 : i32, i32, i32
  }
  func.func @transform_8(%arg0: i32) -> (i32, i32) {
    %c0_i32 = arith.constant 0 : i32
    %c0_i32_0 = arith.constant 0 : i32
    %c0_i32_1 = arith.constant 0 : i32
    return %c0_i32, %c0_i32_0 : i32, i32
  }
  func.func @transform_9(%arg0: i32) -> (i32, i32) {
    %c0_i32 = arith.constant 0 : i32
    %c0_i32_0 = arith.constant 0 : i32
    %c0_i32_1 = arith.constant 0 : i32
    return %c0_i32, %c0_i32_0 : i32, i32
  }
  func.func @transform_10(%arg0: i32) -> (i32, i32, i32) {
    %c0_i32 = arith.constant 0 : i32
    %c0_i32_0 = arith.constant 0 : i32
    %c0_i32_1 = arith.constant 0 : i32
    %c0_i32_2 = arith.constant 0 : i32
    return %c0_i32, %c0_i32_0, %c0_i32_1 : i32, i32, i32
  }
}

</mosaic_0001>

<llo_original>
// kernel: tpu_custom_call.1
$region0: #{tpu_custom_call.1}
  #allocation0 [shape = 'u32[]', space=smem, size = 0x4, offset = 0x4, fixed_abs, tag = 'smem constant byte address 0x4 - core index']
  #allocation1 [shape = 'u32[72,128]{1,0:T(1,128)}', space=vmem, size = 0x9000, scoped, tag = 'internal scratch']
  #allocation2 [shape = 'bf16[2,48,128]{2,1,0:T(8,128)(2,1)}', space=vmem, size = 0x6000, scoped, tag = 'scratch operand']
  #allocation3 [shape = 'bf16[2,48,128]{2,1,0:T(8,128)(2,1)}', space=vmem, size = 0x6000, scoped, tag = 'scratch operand']
  #allocation4 [shape = 'f32[2,16,128]{2,1,0:T(8,128)}', space=vmem, size = 0x4000, scoped, tag = 'scratch operand']
  %s0 = inlined_call_operand.hbm [shape: bf16[2,32,128], index: 0, kind: input, shape index: {}]
  %s1 = inlined_call_operand.hbm [shape: bf16[3,128,128], index: 1, kind: input, shape index: {}]
  %s2 = inlined_call_operand.vmem [shape: f32[1,128], index: 2, kind: input, shape index: {}]
  %s3 = inlined_call_operand.vmem [shape: f32[1,128], index: 3, kind: input, shape index: {}]
  %s4 = inlined_call_operand.hbm [shape: bf16[3,128,128], index: 4, kind: input, shape index: {}]
  %s5 = inlined_call_operand.vmem [shape: f32[1,128], index: 5, kind: input, shape index: {}]
  %s6 = inlined_call_operand.vmem [shape: f32[1,128], index: 6, kind: input, shape index: {}]
  %s7 = inlined_call_operand.hbm [shape: bf16[3,128,128], index: 7, kind: input, shape index: {}]
  %s8 = inlined_call_operand.vmem [shape: f32[1,128], index: 8, kind: input, shape index: {}]
  %s9 = inlined_call_operand.vmem [shape: f32[1,128], index: 9, kind: input, shape index: {}]
  %s10 = inlined_call_operand.hbm [shape: f32[2,16,128], index: 10, kind: output, shape index: {}]
  %s11 = sld [smem:[#allocation0]]
  $region66: #{tpu_custom_call.1} parent=0
    _
  %s13 = ssub.s32 1, %s11
  %s14 = scalar_select 0, %s13, %s11
  $region1: #{tpu_custom_call.1} parent=0
    #allocation5 [shape = 'u8[16384]{0}', space=vmem, size = 0x4000, scoped, tag = 'input window, operand 0, single buffered']
    #allocation6 [shape = 's32[1]{0}', space=sflag, size = 0x4, scoped, tag = 'scoped memory for tpu_custom_call.1']
    #allocation7 [shape = 's32[1]{0}', space=sflag, size = 0x4, scoped, tag = 'scoped memory for tpu_custom_call.1']
    #allocation8 [shape = 'u8[98304]{0}', space=vmem, size = 0x18000, scoped, tag = 'input window, operand 1, single buffered']
    #allocation9 [shape = 's32[1]{0}', space=sflag, size = 0x4, scoped, tag = 'scoped memory for tpu_custom_call.1']
    #allocation10 [shape = 'u8[98304]{0}', space=vmem, size = 0x18000, scoped, tag = 'input window, operand 4, single buffered']
    #allocation11 [shape = 'u8[98304]{0}', space=vmem, size = 0x18000, scoped, tag = 'input window, operand 7, single buffered']
    #allocation12 [shape = 's32[1]{0}', space=sflag, size = 0x4, scoped, tag = 'scoped memory for tpu_custom_call.1']
    #allocation13 [shape = 'u8[16384]{0}', space=vmem, size = 0x4000, scoped, tag = 'output window, operand 0, single buffered']
    %15 = vsyncpa [#allocation6], 0
    %16 = vsyncpa [#allocation9], 0
    %17 = vsyncpa [#allocation12], 0
    %18 = vsyncpa [#allocation7], 0
    // Predicated region
    $region2: #{tpu_custom_call.1} parent=1 // pred_check
      _
    $region3: #{tpu_custom_call.1} parent=1 // pred_check_branch
      %20 = sbr.rel (0) target = $region5
    $region4: #{tpu_custom_call.1} parent=1 // pred_region
      %22 = vsyncadd [#allocation6], 0
      %s23 = sshll.u32 %s0, 4
      %s24 = int_to_ptr.hbm [resolvable:$true] %s23
      %s25 = sshll.u32 [#allocation5], 4
      %s26 = int_to_ptr.vmem [resolvable:$true] %s25
      %31 = dma.hbm_to_vmem [thread:$0]  %s24, 512, %s26, [#allocation6], 64, 64, 4
    $region5: #{tpu_custom_call.1} parent=1 // pred_fallthru
      _
    // Predicated region
    $region6: #{tpu_custom_call.1} parent=1 // pred_check
      _
    $region7: #{tpu_custom_call.1} parent=1 // pred_check_branch
      %33 = sbr.rel (0) target = $region9
    $region8: #{tpu_custom_call.1} parent=1 // pred_region
      %35 = vsyncadd [#allocation9], 0
      %s36 = sshll.u32 %s1, 4
      %s37 = int_to_ptr.hbm [resolvable:$true] %s36
      %s38 = sshll.u32 [#allocation8], 4
      %s39 = int_to_ptr.vmem [resolvable:$true] %s38
      %44 = dma.hbm_to_vmem [thread:$0]  %s37, 3072, %s39, [#allocation9], 64, 64, 4
    $region9: #{tpu_custom_call.1} parent=1 // pred_fallthru
      _
    // Predicated region
    $region10: #{tpu_custom_call.1} parent=1 // pred_check
      _
    $region11: #{tpu_custom_call.1} parent=1 // pred_check_branch
      %46 = sbr.rel (0) target = $region13
    $region12: #{tpu_custom_call.1} parent=1 // pred_region
      _
    $region13: #{tpu_custom_call.1} parent=1 // pred_fallthru
      _
    // Predicated region
    $region14: #{tpu_custom_call.1} parent=1 // pred_check
      _
    $region15: #{tpu_custom_call.1} parent=1 // pred_check_branch
      %48 = sbr.rel (0) target = $region17
    $region16: #{tpu_custom_call.1} parent=1 // pred_region
      _
    $region17: #{tpu_custom_call.1} parent=1 // pred_fallthru
      _
    // Predicated region
    $region18: #{tpu_custom_call.1} parent=1 // pred_check
      _
    $region19: #{tpu_custom_call.1} parent=1 // pred_check_branch
      %50 = sbr.rel (0) target = $region21
    $region20: #{tpu_custom_call.1} parent=1 // pred_region
      %52 = vsyncadd [#allocation9], 0
      %s53 = sshll.u32 %s4, 4
      %s54 = int_to_ptr.hbm [resolvable:$true] %s53
      %s55 = sshll.u32 [#allocation10], 4
      %s56 = int_to_ptr.vmem [resolvable:$true] %s55
      %61 = dma.hbm_to_vmem [thread:$0]  %s54, 3072, %s56, [#allocation9], 64, 64, 4
    $region21: #{tpu_custom_call.1} parent=1 // pred_fallthru
      _
    // Predicated region
    $region22: #{tpu_custom_call.1} parent=1 // pred_check
      _
    $region23: #{tpu_custom_call.1} parent=1 // pred_check_branch
      %63 = sbr.rel (0) target = $region25
    $region24: #{tpu_custom_call.1} parent=1 // pred_region
      _
    $region25: #{tpu_custom_call.1} parent=1 // pred_fallthru
      _
    // Predicated region
    $region26: #{tpu_custom_call.1} parent=1 // pred_check
      _
    $region27: #{tpu_custom_call.1} parent=1 // pred_check_branch
      %65 = sbr.rel (0) target = $region29
    $region28: #{tpu_custom_call.1} parent=1 // pred_region
      _
    $region29: #{tpu_custom_call.1} parent=1 // pred_fallthru
      _
    // Predicated region
    $region30: #{tpu_custom_call.1} parent=1 // pred_check
      _
    $region31: #{tpu_custom_call.1} parent=1 // pred_check_branch
      %67 = sbr.rel (0) target = $region33
    $region32: #{tpu_custom_call.1} parent=1 // pred_region
      %69 = vsyncadd [#allocation12], 0
      %s70 = sshll.u32 %s7, 4
      %s71 = int_to_ptr.hbm [resolvable:$true] %s70
      %s72 = sshll.u32 [#allocation11], 4
      %s73 = int_to_ptr.vmem [resolvable:$true] %s72
      %78 = dma.hbm_to_vmem [thread:$0]  %s71, 3072, %s73, [#allocation12], 64, 64, 4
    $region33: #{tpu_custom_call.1} parent=1 // pred_fallthru
      _
    // Predicated region
    $region34: #{tpu_custom_call.1} parent=1 // pred_check
      _
    $region35: #{tpu_custom_call.1} parent=1 // pred_check_branch
      %80 = sbr.rel (0) target = $region37
    $region36: #{tpu_custom_call.1} parent=1 // pred_region
      _
    $region37: #{tpu_custom_call.1} parent=1 // pred_fallthru
      _
    // Predicated region
    $region38: #{tpu_custom_call.1} parent=1 // pred_check
      _
    $region39: #{tpu_custom_call.1} parent=1 // pred_check_branch
      %82 = sbr.rel (0) target = $region41
    $region40: #{tpu_custom_call.1} parent=1 // pred_region
      _
    $region41: #{tpu_custom_call.1} parent=1 // pred_fallthru
      _
    // Predicated region
    $region42: #{tpu_custom_call.1} parent=1 // pred_check
      _
    $region43: #{tpu_custom_call.1} parent=1 // pred_check_branch
      %84 = sbr.rel (0) target = $region45
    $region44: #{tpu_custom_call.1} parent=1 // pred_region
      %86 = dma.done [#allocation6], 512
    $region45: #{tpu_custom_call.1} parent=1 // pred_fallthru
      _
    // Predicated region
    $region46: #{tpu_custom_call.1} parent=1 // pred_check
      _
    $region47: #{tpu_custom_call.1} parent=1 // pred_check_branch
      %88 = sbr.rel (0) target = $region49
    $region48: #{tpu_custom_call.1} parent=1 // pred_region
      %90 = dma.done [#allocation9], 3072
    $region49: #{tpu_custom_call.1} parent=1 // pred_fallthru
      _
    // Predicated region
    $region50: #{tpu_custom_call.1} parent=1 // pred_check
      _
    $region51: #{tpu_custom_call.1} parent=1 // pred_check_branch
      %92 = sbr.rel (0) target = $region53
    $region52: #{tpu_custom_call.1} parent=1 // pred_region
      %94 = dma.done [#allocation9], 3072
    $region53: #{tpu_custom_call.1} parent=1 // pred_fallthru
      _
    // Predicated region
    $region54: #{tpu_custom_call.1} parent=1 // pred_check
      _
    $region55: #{tpu_custom_call.1} parent=1 // pred_check_branch
      %96 = sbr.rel (0) target = $region57
    $region56: #{tpu_custom_call.1} parent=1 // pred_region
      %98 = dma.done [#allocation12], 3072
    $region57: #{tpu_custom_call.1} parent=1 // pred_fallthru
      _
    %v100 = vlaneseq
    %v101 = vshrl.u32 %v100, 7
    %v102 = vadd.s32 %v101, 8
    %vm103 = vcmp.lt.s32.totalorder %v101, 7
    %vm104 = vcmp.lt.s32.totalorder %v102, 7
    %105 = vst [vmem:[#allocation2] sm:$0xf] 0
    %106 = vst [vmem:[#allocation2 + $0x4] sm:$0xf] 0
    %107 = vst [vmem:[#allocation2 + $0x18] sm:$0xf] 0
    %108 = vst [vmem:[#allocation2 + $0x1c] sm:$0xf] 0
    %109 = vst [vmem:[#allocation2 + $0x10] sm:$0xf] 0
    %110 = vst [vmem:[#allocation2 + $0x14] sm:$0xf] 0
    %111 = vst [vmem:[#allocation2 + $0x28] sm:$0xf] 0
    %112 = vst [vmem:[#allocation2 + $0x2c] sm:$0xf] 0
    %113 = vst [vmem:[#allocation3] sm:$0xf] 0
    %114 = vst [vmem:[#allocation3 + $0x4] sm:$0xf] 0
    %115 = vst [vmem:[#allocation3 + $0x18] sm:$0xf] 0
    %116 = vst [vmem:[#allocation3 + $0x1c] sm:$0xf] 0
    %117 = vst [vmem:[#allocation3 + $0x10] sm:$0xf] 0
    %118 = vst [vmem:[#allocation3 + $0x14] sm:$0xf] 0
    %119 = vst [vmem:[#allocation3 + $0x28] sm:$0xf] 0
    %120 = vst [vmem:[#allocation3 + $0x2c] sm:$0xf] 0
    %v121 = vld [vmem:[#allocation5] sm:$0xf]
    %v122 = vld [vmem:[#allocation5 + $0x4] sm:$0xf]
    %v123 = vld [vmem:[#allocation8] sm:$0xf]
    %v124 = vld [vmem:[#allocation8 + $0x4] sm:$0xf]
    %v125 = vld [vmem:[#allocation8 + $0x8] sm:$0xf]
    %v126 = vld [vmem:[#allocation8 + $0xc] sm:$0xf]
    %v127 = vld [vmem:[#allocation8 + $0x10] sm:$0xf]
    %v128 = vld [vmem:[#allocation8 + $0x14] sm:$0xf]
    %v129 = vld [vmem:[#allocation8 + $0x18] sm:$0xf]
    %v130 = vld [vmem:[#allocation8 + $0x1c] sm:$0xf]
    %v131 = vld [vmem:[#allocation8 + $0x20] sm:$0xf]
    %v132 = vld [vmem:[#allocation8 + $0x24] sm:$0xf]
    %v133 = vld [vmem:[#allocation8 + $0x28] sm:$0xf]
    %v134 = vld [vmem:[#allocation8 + $0x2c] sm:$0xf]
    %v135 = vld [vmem:[#allocation8 + $0x30] sm:$0xf]
    %v136 = vld [vmem:[#allocation8 + $0x34] sm:$0xf]
    %v137 = vld [vmem:[#allocation8 + $0x38] sm:$0xf]
    %v138 = vld [vmem:[#allocation8 + $0x3c] sm:$0xf]
    %v139 = vld [vmem:[#allocation5 + $0x8] sm:$0x1]
    %s140 = scalar_lea.vmem [#allocation8], 64
    %v141 = vld [vmem:[%s140] sm:$0xf]
    %v142 = vld [vmem:[%s140 + $0x4] sm:$0xf]
    %v143 = vld [vmem:[%s140 + $0x8] sm:$0xf]
    %v144 = vld [vmem:[%s140 + $0xc] sm:$0xf]
    %v145 = vld [vmem:[%s140 + $0x10] sm:$0xf]
    %v146 = vld [vmem:[%s140 + $0x14] sm:$0xf]
    %v147 = vld [vmem:[%s140 + $0x18] sm:$0xf]
    %v148 = vld [vmem:[%s140 + $0x1c] sm:$0xf]
    %v149 = vld [vmem:[%s140 + $0x20] sm:$0xf]
    %v150 = vld [vmem:[%s140 + $0x24] sm:$0xf]
    %v151 = vld [vmem:[%s140 + $0x28] sm:$0xf]
    %v152 = vld [vmem:[%s140 + $0x2c] sm:$0xf]
    %v153 = vld [vmem:[%s140 + $0x30] sm:$0xf]
    %v154 = vld [vmem:[%s140 + $0x34] sm:$0xf]
    %v155 = vld [vmem:[%s140 + $0x38] sm:$0xf]
    %v156 = vld [vmem:[%s140 + $0x3c] sm:$0xf]
    %v160 = vunpack.c.l.b16 %v121
    %v161 = vunpack.c.l.b16 %v122
    %v162 = vunpack.c.l.b16 %v139
    %v163 = vpack.c.b16 %v161, %v160
    %v164 = vpack.c.b16 %v162, %v162
    %vm165 = vsmask.f32 7424
    %v167 = vshrl.u32 %v163, 16
    %v169 = vshll.u32 %v163, 16
    %v171 = vrot.slane %v169, 1
    %v172 = vor.u32 %v167, %v171
    %v174 = vshll.u32 %v164, 16
    %v176 = vrot.slane %v174, 1
    %v177 = vsel %vm165, %v172, %v176
    %v195 = vunpack.c.l.b16 %v141
    %v196 = vunpack.c.l.b16 %v142
    %v197 = vunpack.c.l.b16 %v143
    %v198 = vunpack.c.l.b16 %v144
    %v199 = vunpack.c.l.b16 %v145
    %v200 = vunpack.c.l.b16 %v146
    %v201 = vunpack.c.l.b16 %v147
    %v202 = vunpack.c.l.b16 %v148
    %v203 = vunpack.c.l.b16 %v149
    %v204 = vunpack.c.l.b16 %v150
    %v205 = vunpack.c.l.b16 %v151
    %v206 = vunpack.c.l.b16 %v152
    %v207 = vunpack.c.l.b16 %v153
    %v208 = vunpack.c.l.b16 %v154
    %v209 = vunpack.c.l.b16 %v155
    %v210 = vunpack.c.l.b16 %v156
    %v211 = vpack.c.b16 %v196, %v195
    %v212 = vpack.c.b16 %v198, %v197
    %v213 = vpack.c.b16 %v200, %v199
    %v214 = vpack.c.b16 %v202, %v201
    %v215 = vpack.c.b16 %v204, %v203
    %v216 = vpack.c.b16 %v206, %v205
    %v217 = vpack.c.b16 %v208, %v207
    %v218 = vpack.c.b16 %v210, %v209
    %227 = vmatpush.bf16.msra.mxu0 %v218
    %228 = vmatpush.bf16.msra.mxu0 %v217
    %229 = vmatpush.bf16.msra.mxu0 %v216
    %230 = vmatpush.bf16.msra.mxu0 %v215
    %231 = vmatpush.bf16.msra.mxu0 %v214
    %232 = vmatpush.bf16.msra.mxu0 %v213
    %233 = vmatpush.bf16.msra.mxu0 %v212
    %234 = vmatpush.bf16.msra.mxu0 %v211
    %235 = vmatmul.bf16.gmra.mxu0 %v177
    %v236 = vpop.f32.mrf.mxu0
    %v237 = vadd.f32 0.0, %v236
    %v238 = vpop.f32.mrf.mxu0
    %v239 = vadd.f32 0.0, %v238
    %240 = vdwg.mxu0
    %v258 = vunpack.c.l.b16 %v123
    %v259 = vunpack.c.l.b16 %v124
    %v260 = vunpack.c.l.b16 %v125
    %v261 = vunpack.c.l.b16 %v126
    %v262 = vunpack.c.l.b16 %v127
    %v263 = vunpack.c.l.b16 %v128
    %v264 = vunpack.c.l.b16 %v129
    %v265 = vunpack.c.l.b16 %v130
    %v266 = vunpack.c.l.b16 %v131
    %v267 = vunpack.c.l.b16 %v132
    %v268 = vunpack.c.l.b16 %v133
    %v269 = vunpack.c.l.b16 %v134
    %v270 = vunpack.c.l.b16 %v135
    %v271 = vunpack.c.l.b16 %v136
    %v272 = vunpack.c.l.b16 %v137
    %v273 = vunpack.c.l.b16 %v138
    %v274 = vpack.c.b16 %v259, %v258
    %v275 = vpack.c.b16 %v261, %v260
    %v276 = vpack.c.b16 %v263, %v262
    %v277 = vpack.c.b16 %v265, %v264
    %v278 = vpack.c.b16 %v267, %v266
    %v279 = vpack.c.b16 %v269, %v268
    %v280 = vpack.c.b16 %v271, %v270
    %v281 = vpack.c.b16 %v273, %v272
    %290 = vmatpush.bf16.msra.mxu0 %v281
    %291 = vmatpush.bf16.msra.mxu0 %v280
    %292 = vmatpush.bf16.msra.mxu0 %v279
    %293 = vmatpush.bf16.msra.mxu0 %v278
    %294 = vmatpush.bf16.msra.mxu0 %v277
    %295 = vmatpush.bf16.msra.mxu0 %v276
    %296 = vmatpush.bf16.msra.mxu0 %v275
    %297 = vmatpush.bf16.msra.mxu0 %v274
    %298 = vmatmul.bf16.gmra.mxu0 %v163
    %v299 = vpop.f32.mrf.mxu0
    %v300 = vadd.f32 %v237, %v299
    %v301 = vpop.f32.mrf.mxu0
    %v302 = vadd.f32 %v239, %v301
    %303 = vdwg.mxu0
    %v304 = vld [vmem:[#allocation5] sm:$0xe]
    %s305 = scalar_lea.vmem [#allocation8], 128
    %v306 = vld [vmem:[%s305] sm:$0xf]
    %v307 = vld [vmem:[%s305 + $0x4] sm:$0xf]
    %v308 = vld [vmem:[%s305 + $0x8] sm:$0xf]
    %v309 = vld [vmem:[%s305 + $0xc] sm:$0xf]
    %v310 = vld [vmem:[%s305 + $0x10] sm:$0xf]
    %v311 = vld [vmem:[%s305 + $0x14] sm:$0xf]
    %v312 = vld [vmem:[%s305 + $0x18] sm:$0xf]
    %v313 = vld [vmem:[%s305 + $0x1c] sm:$0xf]
    %v314 = vld [vmem:[%s305 + $0x20] sm:$0xf]
    %v315 = vld [vmem:[%s305 + $0x24] sm:$0xf]
    %v316 = vld [vmem:[%s305 + $0x28] sm:$0xf]
    %v317 = vld [vmem:[%s305 + $0x2c] sm:$0xf]
    %v318 = vld [vmem:[%s305 + $0x30] sm:$0xf]
    %v319 = vld [vmem:[%s305 + $0x34] sm:$0xf]
    %v320 = vld [vmem:[%s305 + $0x38] sm:$0xf]
    %v321 = vld [vmem:[%s305 + $0x3c] sm:$0xf]
    %v323 = vunpack.c.l.b16 %v304
    %v324 = vpack.c.b16 %v161, %v323
    %vm325 = vcmask 1046528
    %v326 = vrot.slane %v324, 1
    %v327 = vrot.slane %v164, 1
    %v328 = vsel %vm325, %v326, %v327
    %v346 = vunpack.c.l.b16 %v306
    %v347 = vunpack.c.l.b16 %v307
    %v348 = vunpack.c.l.b16 %v308
    %v349 = vunpack.c.l.b16 %v309
    %v350 = vunpack.c.l.b16 %v310
    %v351 = vunpack.c.l.b16 %v311
    %v352 = vunpack.c.l.b16 %v312
    %v353 = vunpack.c.l.b16 %v313
    %v354 = vunpack.c.l.b16 %v314
    %v355 = vunpack.c.l.b16 %v315
    %v356 = vunpack.c.l.b16 %v316
    %v357 = vunpack.c.l.b16 %v317
    %v358 = vunpack.c.l.b16 %v318
    %v359 = vunpack.c.l.b16 %v319
    %v360 = vunpack.c.l.b16 %v320
    %v361 = vunpack.c.l.b16 %v321
    %v362 = vpack.c.b16 %v347, %v346
    %v363 = vpack.c.b16 %v349, %v348
    %v364 = vpack.c.b16 %v351, %v350
    %v365 = vpack.c.b16 %v353, %v352
    %v366 = vpack.c.b16 %v355, %v354
    %v367 = vpack.c.b16 %v357, %v356
    %v368 = vpack.c.b16 %v359, %v358
    %v369 = vpack.c.b16 %v361, %v360
    %378 = vmatpush.bf16.msra.mxu0 %v369
    %379 = vmatpush.bf16.msra.mxu0 %v368
    %380 = vmatpush.bf16.msra.mxu0 %v367
    %381 = vmatpush.bf16.msra.mxu0 %v366
    %382 = vmatpush.bf16.msra.mxu0 %v365
    %383 = vmatpush.bf16.msra.mxu0 %v364
    %384 = vmatpush.bf16.msra.mxu0 %v363
    %385 = vmatpush.bf16.msra.mxu0 %v362
    %386 = vmatmul.bf16.gmra.mxu0 %v328
    %v387 = vpop.f32.mrf.mxu0
    %v388 = vadd.f32 0.0, %v387
    %v389 = vpop.f32.mrf.mxu0
    %v390 = vadd.f32 0.0, %v389
    %391 = vdwg.mxu0
    %v392 = vadd.f32 %v300, %v388
    %v393 = vadd.f32 %v302, %v390
    %s394 = scalar_lea.vmem [#allocation5], 16
    %v395 = vld [vmem:[%s394] sm:$0xf]
    %v396 = vld [vmem:[%s394 + $0x4] sm:$0xf]
    %v397 = vld [vmem:[%s394 + $0x8] sm:$0x1]
    %v401 = vunpack.c.l.b16 %v395
    %v402 = vunpack.c.l.b16 %v396
    %v403 = vunpack.c.l.b16 %v397
    %v404 = vpack.c.b16 %v402, %v401
    %v405 = vpack.c.b16 %v403, %v403
    %v407 = vshrl.u32 %v404, 16
    %v409 = vshll.u32 %v404, 16
    %v411 = vrot.slane %v409, 1
    %v412 = vor.u32 %v407, %v411
    %v414 = vshll.u32 %v405, 16
    %v416 = vrot.slane %v414, 1
    %v417 = vsel %vm165, %v412, %v416
    %419 = vmatpush.bf16.msra.mxu0 %v218
    %420 = vmatpush.bf16.msra.mxu0 %v217
    %421 = vmatpush.bf16.msra.mxu0 %v216
    %422 = vmatpush.bf16.msra.mxu0 %v215
    %423 = vmatpush.bf16.msra.mxu0 %v214
    %424 = vmatpush.bf16.msra.mxu0 %v213
    %425 = vmatpush.bf16.msra.mxu0 %v212
    %426 = vmatpush.bf16.msra.mxu0 %v211
    %427 = vmatmul.bf16.gmra.mxu0 %v417
    %v428 = vpop.f32.mrf.mxu0
    %v429 = vadd.f32 0.0, %v428
    %v430 = vpop.f32.mrf.mxu0
    %v431 = vadd.f32 0.0, %v430
    %432 = vdwg.mxu0
    %434 = vmatpush.bf16.msra.mxu0 %v281
    %435 = vmatpush.bf16.msra.mxu0 %v280
    %436 = vmatpush.bf16.msra.mxu0 %v279
    %437 = vmatpush.bf16.msra.mxu0 %v278
    %438 = vmatpush.bf16.msra.mxu0 %v277
    %439 = vmatpush.bf16.msra.mxu0 %v276
    %440 = vmatpush.bf16.msra.mxu0 %v275
    %441 = vmatpush.bf16.msra.mxu0 %v274
    %442 = vmatmul.bf16.gmra.mxu0 %v404
    %v443 = vpop.f32.mrf.mxu0
    %v444 = vadd.f32 %v429, %v443
    %v445 = vpop.f32.mrf.mxu0
    %v446 = vadd.f32 %v431, %v445
    %447 = vdwg.mxu0
    %v448 = vld [vmem:[%s394] sm:$0xe]
    %v450 = vunpack.c.l.b16 %v448
    %v451 = vpack.c.b16 %v402, %v450
    %v452 = vrot.slane %v451, 1
    %v453 = vrot.slane %v405, 1
    %v454 = vsel %vm325, %v452, %v453
    %456 = vmatpush.bf16.msra.mxu0 %v369
    %457 = vmatpush.bf16.msra.mxu0 %v368
    %458 = vmatpush.bf16.msra.mxu0 %v367
    %459 = vmatpush.bf16.msra.mxu0 %v366
    %460 = vmatpush.bf16.msra.mxu0 %v365
    %461 = vmatpush.bf16.msra.mxu0 %v364
    %462 = vmatpush.bf16.msra.mxu0 %v363
    %463 = vmatpush.bf16.msra.mxu0 %v362
    %464 = vmatmul.bf16.gmra.mxu0 %v454
    %v465 = vpop.f32.mrf.mxu0
    %v466 = vadd.f32 0.0, %v465
    %v467 = vpop.f32.mrf.mxu0
    %v468 = vadd.f32 0.0, %v467
    %469 = vdwg.mxu0
    %v470 = vadd.f32 %v444, %v466
    %v471 = vadd.f32 %v446, %v468
    %v472 = vsel %vm103, 1, 0
    %v473 = vsel %vm104, 1, 0
    %vm474 = vcmp.eq.s32.totalorder %v472, 1
    %vm475 = vcmp.eq.s32.totalorder %v473, 1
    %v476 = vsel %vm474, %v392, 0.0
    %v477 = vsel %vm475, %v393, 0.0
    %v478 = vadd.f32 %v476, %v477
    %v479 = vrot.slane %v478, 4
    %v480 = vadd.f32 %v478, %v479
    %v481 = vrot.slane %v480, 2
    %v482 = vadd.f32 %v480, %v481
    %v483 = vrot.slane %v482, 1
    %v484 = vadd.f32 %v482, %v483
    %v485 = vadd.f32 %v484, 0.0
    %v486 = vsel %vm474, %v470, 0.0
    %v487 = vsel %vm475, %v471, 0.0
    %v488 = vadd.f32 %v486, %v487
    %v489 = vrot.slane %v488, 4
    %v490 = vadd.f32 %v488, %v489
    %v491 = vrot.slane %v490, 2
    %v492 = vadd.f32 %v490, %v491
    %v493 = vrot.slane %v492, 1
    %v494 = vadd.f32 %v492, %v493
    %v495 = vadd.f32 %v485, %v494
    %v496 = vmul.f32 %v495, 0.071428575
    %v497 = vsub.f32 %v392, %v496
    %v498 = vsub.f32 %v393, %v496
    %v499 = vmul.f32 %v497, %v497
    %v500 = vmul.f32 %v498, %v498
    %v501 = vsel %vm474, %v499, 0.0
    %v502 = vsel %vm475, %v500, 0.0
    %v503 = vadd.f32 %v501, %v502
    %v504 = vrot.slane %v503, 4
    %v505 = vadd.f32 %v503, %v504
    %v506 = vrot.slane %v505, 2
    %v507 = vadd.f32 %v505, %v506
    %v508 = vrot.slane %v507, 1
    %v509 = vadd.f32 %v507, %v508
    %v510 = vadd.f32 %v509, 0.0
    %v511 = vsub.f32 %v470, %v496
    %v512 = vsub.f32 %v471, %v496
    %v513 = vmul.f32 %v511, %v511
    %v514 = vmul.f32 %v512, %v512
    %v515 = vsel %vm474, %v513, 0.0
    %v516 = vsel %vm475, %v514, 0.0
    %v517 = vadd.f32 %v515, %v516
    %v518 = vrot.slane %v517, 4
    %v519 = vadd.f32 %v517, %v518
    %v520 = vrot.slane %v519, 2
    %v521 = vadd.f32 %v519, %v520
    %v522 = vrot.slane %v521, 1
    %v523 = vadd.f32 %v521, %v522
    %v524 = vadd.f32 %v510, %v523
    %v525 = vmul.f32 %v524, 0.071428575
    %v526 = vadd.f32 %v525, 1e-05
    %v527 = vrsqrt.pop %v526
    %v528 = vmul.f32 %v527, %v526
    %v529 = vmul.f32 %v528, %v527
    %v530 = vmul.f32 0.5, %v529
    %v531 = vsub.f32 1.5, %v530
    %v532 = vmul.f32 %v527, %v531
    %vm533 = vweird.f32 %v526
    %vm534 = vweird.f32 %v527
    %vm535 = vmor %vm533, %vm534
    %v536 = vsel %vm535, %v527, %v532
    %v537 = vld [vmem:[%s2] sm:$0x1]
    %v538 = vmul.f32 %v536, %v537
    %v539 = vperm.slane %v538, 0
    %v540 = vmul.f32 %v497, %v539
    %v541 = vmul.f32 %v498, %v539
    %v542 = vld [vmem:[%s3] sm:$0x1]
    %v544 = vperm.slane %v542, 0
    %v546 = vadd.f32 %v540, %v544
    %v547 = vadd.f32 %v541, %v544
    %v548 = vmax.f32 %v546, 0.0
    %v549 = vmax.f32 %v547, 0.0
    %v550 = vsel %vm474, %v548, 0.0
    %v551 = vsel %vm475, %v549, 0.0
    %v552 = vmul.f32 %v511, %v539
    %v553 = vmul.f32 %v512, %v539
    %v554 = vadd.f32 %v552, %v544
    %v555 = vadd.f32 %v553, %v544
    %v556 = vmax.f32 %v554, 0.0
    %v557 = vmax.f32 %v555, 0.0
    %v558 = vsel %vm474, %v556, 0.0
    %v559 = vsel %vm475, %v557, 0.0
    %560 = vst [vmem:[#allocation4] sm:$0xff] %v550
    %561 = vst [vmem:[#allocation4 + $0x8] sm:$0xff] %v551
    %v562 = vpack.c.bf16 %v550, %v550
    %v563 = vpack.c.bf16 %v551, %v551
    %564 = vst [vmem:[#allocation2 + $0x8] sm:$0xf] %v562
    %565 = vst [vmem:[#allocation2 + $0xc] sm:$0xf] %v563
    %s566 = scalar_lea.vmem [#allocation4], 16
    %567 = vst [vmem:[%s566] sm:$0xff] %v558
    %568 = vst [vmem:[%s566 + $0x8] sm:$0xff] %v559
    %v569 = vpack.c.bf16 %v558, %v558
    %v570 = vpack.c.bf16 %v559, %v559
    %s571 = scalar_lea.vmem [#allocation2], 24
    %572 = vst [vmem:[%s571 + $0x8] sm:$0xf] %v569
    %573 = vst [vmem:[%s571 + $0xc] sm:$0xf] %v570
    %v574 = vld [vmem:[#allocation2 + $0x4] sm:$0x8]
    %v575 = vld [vmem:[#allocation2 + $0x8] sm:$0xf]
    %v576 = vld [vmem:[#allocation2 + $0xc] sm:$0xf]
    %v577 = vld [vmem:[#allocation10] sm:$0xf]
    %v578 = vld [vmem:[#allocation10 + $0x4] sm:$0xf]
    %v579 = vld [vmem:[#allocation10 + $0x8] sm:$0xf]
    %v580 = vld [vmem:[#allocation10 + $0xc] sm:$0xf]
    %v581 = vld [vmem:[#allocation10 + $0x10] sm:$0xf]
    %v582 = vld [vmem:[#allocation10 + $0x14] sm:$0xf]
    %v583 = vld [vmem:[#allocation10 + $0x18] sm:$0xf]
    %v584 = vld [vmem:[#allocation10 + $0x1c] sm:$0xf]
    %v585 = vld [vmem:[#allocation10 + $0x20] sm:$0xf]
    %v586 = vld [vmem:[#allocation10 + $0x24] sm:$0xf]
    %v587 = vld [vmem:[#allocation10 + $0x28] sm:$0xf]
    %v588 = vld [vmem:[#allocation10 + $0x2c] sm:$0xf]
    %v589 = vld [vmem:[#allocation10 + $0x30] sm:$0xf]
    %v590 = vld [vmem:[#allocation10 + $0x34] sm:$0xf]
    %v591 = vld [vmem:[#allocation10 + $0x38] sm:$0xf]
    %v592 = vld [vmem:[#allocation10 + $0x3c] sm:$0xf]
    %s593 = scalar_lea.vmem [#allocation10], 64
    %v594 = vld [vmem:[%s593] sm:$0xf]
    %v595 = vld [vmem:[%s593 + $0x4] sm:$0xf]
    %v596 = vld [vmem:[%s593 + $0x8] sm:$0xf]
    %v597 = vld [vmem:[%s593 + $0xc] sm:$0xf]
    %v598 = vld [vmem:[%s593 + $0x10] sm:$0xf]
    %v599 = vld [vmem:[%s593 + $0x14] sm:$0xf]
    %v600 = vld [vmem:[%s593 + $0x18] sm:$0xf]
    %v601 = vld [vmem:[%s593 + $0x1c] sm:$0xf]
    %v602 = vld [vmem:[%s593 + $0x20] sm:$0xf]
    %v603 = vld [vmem:[%s593 + $0x24] sm:$0xf]
    %v604 = vld [vmem:[%s593 + $0x28] sm:$0xf]
    %v605 = vld [vmem:[%s593 + $0x2c] sm:$0xf]
    %v606 = vld [vmem:[%s593 + $0x30] sm:$0xf]
    %v607 = vld [vmem:[%s593 + $0x34] sm:$0xf]
    %v608 = vld [vmem:[%s593 + $0x38] sm:$0xf]
    %v609 = vld [vmem:[%s593 + $0x3c] sm:$0xf]
    %v612 = vunpack.c.l.b16 %v575
    %v613 = vunpack.c.l.b16 %v576
    %v614 = vpack.c.b16 %v613, %v612
    %v632 = vunpack.c.l.b16 %v594
    %v633 = vunpack.c.l.b16 %v595
    %v634 = vunpack.c.l.b16 %v596
    %v635 = vunpack.c.l.b16 %v597
    %v636 = vunpack.c.l.b16 %v598
    %v637 = vunpack.c.l.b16 %v599
    %v638 = vunpack.c.l.b16 %v600
    %v639 = vunpack.c.l.b16 %v601
    %v640 = vunpack.c.l.b16 %v602
    %v641 = vunpack.c.l.b16 %v603
    %v642 = vunpack.c.l.b16 %v604
    %v643 = vunpack.c.l.b16 %v605
    %v644 = vunpack.c.l.b16 %v606
    %v645 = vunpack.c.l.b16 %v607
    %v646 = vunpack.c.l.b16 %v608
    %v647 = vunpack.c.l.b16 %v609
    %v648 = vpack.c.b16 %v633, %v632
    %v649 = vpack.c.b16 %v635, %v634
    %v650 = vpack.c.b16 %v637, %v636
    %v651 = vpack.c.b16 %v639, %v638
    %v652 = vpack.c.b16 %v641, %v640
    %v653 = vpack.c.b16 %v643, %v642
    %v654 = vpack.c.b16 %v645, %v644
    %v655 = vpack.c.b16 %v647, %v646
    %664 = vmatpush.bf16.msra.mxu0 %v655
    %665 = vmatpush.bf16.msra.mxu0 %v654
    %666 = vmatpush.bf16.msra.mxu0 %v653
    %667 = vmatpush.bf16.msra.mxu0 %v652
    %668 = vmatpush.bf16.msra.mxu0 %v651
    %669 = vmatpush.bf16.msra.mxu0 %v650
    %670 = vmatpush.bf16.msra.mxu0 %v649
    %671 = vmatpush.bf16.msra.mxu0 %v648
    %672 = vmatmul.bf16.gmra.mxu0 %v614
    %v673 = vpop.f32.mrf.mxu0
    %v674 = vadd.f32 0.0, %v673
    %v675 = vpop.f32.mrf.mxu0
    %v676 = vadd.f32 0.0, %v675
    %677 = vdwg.mxu0
    %v679 = vunpack.c.l.b16 %v574
    %v680 = vpack.c.b16 %v612, %v679
    %v681 = vpack.c.b16 %v613, %v613
    %vm682 = vsmask.f32 4352
    %v684 = vshrl.u32 %v680, 16
    %v686 = vrot.slane %v684, 3
    %v687 = vshll.u32 %v680, 16
    %v689 = vrot.slane %v687, 4
    %v690 = vor.u32 %v686, %v689
    %v692 = vshrl.u32 %v681, 16
    %v694 = vrot.slane %v692, 3
    %v695 = vshll.u32 %v681, 16
    %v697 = vrot.slane %v695, 4
    %v698 = vor.u32 %v694, %v697
    %v699 = vsel %vm682, %v690, %v698
    %v717 = vunpack.c.l.b16 %v577
    %v718 = vunpack.c.l.b16 %v578
    %v719 = vunpack.c.l.b16 %v579
    %v720 = vunpack.c.l.b16 %v580
    %v721 = vunpack.c.l.b16 %v581
    %v722 = vunpack.c.l.b16 %v582
    %v723 = vunpack.c.l.b16 %v583
    %v724 = vunpack.c.l.b16 %v584
    %v725 = vunpack.c.l.b16 %v585
    %v726 = vunpack.c.l.b16 %v586
    %v727 = vunpack.c.l.b16 %v587
    %v728 = vunpack.c.l.b16 %v588
    %v729 = vunpack.c.l.b16 %v589
    %v730 = vunpack.c.l.b16 %v590
    %v731 = vunpack.c.l.b16 %v591
    %v732 = vunpack.c.l.b16 %v592
    %v733 = vpack.c.b16 %v718, %v717
    %v734 = vpack.c.b16 %v720, %v719
    %v735 = vpack.c.b16 %v722, %v721
    %v736 = vpack.c.b16 %v724, %v723
    %v737 = vpack.c.b16 %v726, %v725
    %v738 = vpack.c.b16 %v728, %v727
    %v739 = vpack.c.b16 %v730, %v729
    %v740 = vpack.c.b16 %v732, %v731
    %749 = vmatpush.bf16.msra.mxu0 %v740
    %750 = vmatpush.bf16.msra.mxu0 %v739
    %751 = vmatpush.bf16.msra.mxu0 %v738
    %752 = vmatpush.bf16.msra.mxu0 %v737
    %753 = vmatpush.bf16.msra.mxu0 %v736
    %754 = vmatpush.bf16.msra.mxu0 %v735
    %755 = vmatpush.bf16.msra.mxu0 %v734
    %756 = vmatpush.bf16.msra.mxu0 %v733
    %757 = vmatmul.bf16.gmra.mxu0 %v699
    %v758 = vpop.f32.mrf.mxu0
    %v759 = vadd.f32 %v674, %v758
    %v760 = vpop.f32.mrf.mxu0
    %v761 = vadd.f32 %v676, %v760
    %762 = vdwg.mxu0
    %v763 = vld [vmem:[#allocation2 + $0x8] sm:$0xf]
    %v764 = vld [vmem:[#allocation2 + $0xc] sm:$0xf]
    %v765 = vld [vmem:[#allocation2 + $0x10] sm:$0x1]
    %s766 = scalar_lea.vmem [#allocation10], 128
    %v767 = vld [vmem:[%s766] sm:$0xf]
    %v768 = vld [vmem:[%s766 + $0x4] sm:$0xf]
    %v769 = vld [vmem:[%s766 + $0x8] sm:$0xf]
    %v770 = vld [vmem:[%s766 + $0xc] sm:$0xf]
    %v771 = vld [vmem:[%s766 + $0x10] sm:$0xf]
    %v772 = vld [vmem:[%s766 + $0x14] sm:$0xf]
    %v773 = vld [vmem:[%s766 + $0x18] sm:$0xf]
    %v774 = vld [vmem:[%s766 + $0x1c] sm:$0xf]
    %v775 = vld [vmem:[%s766 + $0x20] sm:$0xf]
    %v776 = vld [vmem:[%s766 + $0x24] sm:$0xf]
    %v777 = vld [vmem:[%s766 + $0x28] sm:$0xf]
    %v778 = vld [vmem:[%s766 + $0x2c] sm:$0xf]
    %v779 = vld [vmem:[%s766 + $0x30] sm:$0xf]
    %v780 = vld [vmem:[%s766 + $0x34] sm:$0xf]
    %v781 = vld [vmem:[%s766 + $0x38] sm:$0xf]
    %v782 = vld [vmem:[%s766 + $0x3c] sm:$0xf]
    %v786 = vunpack.c.l.b16 %v763
    %v787 = vunpack.c.l.b16 %v764
    %v788 = vunpack.c.l.b16 %v765
    %v789 = vpack.c.b16 %v787, %v786
    %v790 = vpack.c.b16 %v788, %v788
    %v792 = vshrl.u32 %v789, 16
    %v794 = vshll.u32 %v789, 16
    %v796 = vrot.slane %v794, 1
    %v797 = vor.u32 %v792, %v796
    %v799 = vshll.u32 %v790, 16
    %v801 = vrot.slane %v799, 1
    %v802 = vsel %vm165, %v797, %v801
    %v820 = vunpack.c.l.b16 %v767
    %v821 = vunpack.c.l.b16 %v768
    %v822 = vunpack.c.l.b16 %v769
    %v823 = vunpack.c.l.b16 %v770
    %v824 = vunpack.c.l.b16 %v771
    %v825 = vunpack.c.l.b16 %v772
    %v826 = vunpack.c.l.b16 %v773
    %v827 = vunpack.c.l.b16 %v774
    %v828 = vunpack.c.l.b16 %v775
    %v829 = vunpack.c.l.b16 %v776
    %v830 = vunpack.c.l.b16 %v777
    %v831 = vunpack.c.l.b16 %v778
    %v832 = vunpack.c.l.b16 %v779
    %v833 = vunpack.c.l.b16 %v780
    %v834 = vunpack.c.l.b16 %v781
    %v835 = vunpack.c.l.b16 %v782
    %v836 = vpack.c.b16 %v821, %v820
    %v837 = vpack.c.b16 %v823, %v822
    %v838 = vpack.c.b16 %v825, %v824
    %v839 = vpack.c.b16 %v827, %v826
    %v840 = vpack.c.b16 %v829, %v828
    %v841 = vpack.c.b16 %v831, %v830
    %v842 = vpack.c.b16 %v833, %v832
    %v843 = vpack.c.b16 %v835, %v834
    %852 = vmatpush.bf16.msra.mxu0 %v843
    %853 = vmatpush.bf16.msra.mxu0 %v842
    %854 = vmatpush.bf16.msra.mxu0 %v841
    %855 = vmatpush.bf16.msra.mxu0 %v840
    %856 = vmatpush.bf16.msra.mxu0 %v839
    %857 = vmatpush.bf16.msra.mxu0 %v838
    %858 = vmatpush.bf16.msra.mxu0 %v837
    %859 = vmatpush.bf16.msra.mxu0 %v836
    %860 = vmatmul.bf16.gmra.mxu0 %v802
    %v861 = vpop.f32.mrf.mxu0
    %v862 = vadd.f32 0.0, %v861
    %v863 = vpop.f32.mrf.mxu0
    %v864 = vadd.f32 0.0, %v863
    %865 = vdwg.mxu0
    %v866 = vadd.f32 %v759, %v862
    %v867 = vadd.f32 %v761, %v864
    %v868 = vld [vmem:[%s571 + $0x4] sm:$0x8]
    %v869 = vld [vmem:[%s571 + $0x8] sm:$0xf]
    %v870 = vld [vmem:[%s571 + $0xc] sm:$0xf]
    %v873 = vunpack.c.l.b16 %v869
    %v874 = vunpack.c.l.b16 %v870
    %v875 = vpack.c.b16 %v874, %v873
    %877 = vmatpush.bf16.msra.mxu0 %v655
    %878 = vmatpush.bf16.msra.mxu0 %v654
    %879 = vmatpush.bf16.msra.mxu0 %v653
    %880 = vmatpush.bf16.msra.mxu0 %v652
    %881 = vmatpush.bf16.msra.mxu0 %v651
    %882 = vmatpush.bf16.msra.mxu0 %v650
    %883 = vmatpush.bf16.msra.mxu0 %v649
    %884 = vmatpush.bf16.msra.mxu0 %v648
    %885 = vmatmul.bf16.gmra.mxu0 %v875
    %v886 = vpop.f32.mrf.mxu0
    %v887 = vadd.f32 0.0, %v886
    %v888 = vpop.f32.mrf.mxu0
    %v889 = vadd.f32 0.0, %v888
    %890 = vdwg.mxu0
    %v892 = vunpack.c.l.b16 %v868
    %v893 = vpack.c.b16 %v873, %v892
    %v894 = vpack.c.b16 %v874, %v874
    %v896 = vshrl.u32 %v893, 16
    %v898 = vrot.slane %v896, 3
    %v899 = vshll.u32 %v893, 16
    %v901 = vrot.slane %v899, 4
    %v902 = vor.u32 %v898, %v901
    %v904 = vshrl.u32 %v894, 16
    %v906 = vrot.slane %v904, 3
    %v907 = vshll.u32 %v894, 16
    %v909 = vrot.slane %v907, 4
    %v910 = vor.u32 %v906, %v909
    %v911 = vsel %vm682, %v902, %v910
    %913 = vmatpush.bf16.msra.mxu0 %v740
    %914 = vmatpush.bf16.msra.mxu0 %v739
    %915 = vmatpush.bf16.msra.mxu0 %v738
    %916 = vmatpush.bf16.msra.mxu0 %v737
    %917 = vmatpush.bf16.msra.mxu0 %v736
    %918 = vmatpush.bf16.msra.mxu0 %v735
    %919 = vmatpush.bf16.msra.mxu0 %v734
    %920 = vmatpush.bf16.msra.mxu0 %v733
    %921 = vmatmul.bf16.gmra.mxu0 %v911
    %v922 = vpop.f32.mrf.mxu0
    %v923 = vadd.f32 %v887, %v922
    %v924 = vpop.f32.mrf.mxu0
    %v925 = vadd.f32 %v889, %v924
    %926 = vdwg.mxu0
    %v927 = vld [vmem:[%s571 + $0x8] sm:$0xf]
    %v928 = vld [vmem:[%s571 + $0xc] sm:$0xf]
    %v929 = vld [vmem:[%s571 + $0x10] sm:$0x1]
    %v933 = vunpack.c.l.b16 %v927
    %v934 = vunpack.c.l.b16 %v928
    %v935 = vunpack.c.l.b16 %v929
    %v936 = vpack.c.b16 %v934, %v933
    %v937 = vpack.c.b16 %v935, %v935
    %v939 = vshrl.u32 %v936, 16
    %v941 = vshll.u32 %v936, 16
    %v943 = vrot.slane %v941, 1
    %v944 = vor.u32 %v939, %v943
    %v946 = vshll.u32 %v937, 16
    %v948 = vrot.slane %v946, 1
    %v949 = vsel %vm165, %v944, %v948
    %951 = vmatpush.bf16.msra.mxu0 %v843
    %952 = vmatpush.bf16.msra.mxu0 %v842
    %953 = vmatpush.bf16.msra.mxu0 %v841
    %954 = vmatpush.bf16.msra.mxu0 %v840
    %955 = vmatpush.bf16.msra.mxu0 %v839
    %956 = vmatpush.bf16.msra.mxu0 %v838
    %957 = vmatpush.bf16.msra.mxu0 %v837
    %958 = vmatpush.bf16.msra.mxu0 %v836
    %959 = vmatmul.bf16.gmra.mxu0 %v949
    %v960 = vpop.f32.mrf.mxu0
    %v961 = vadd.f32 0.0, %v960
    %v962 = vpop.f32.mrf.mxu0
    %v963 = vadd.f32 0.0, %v962
    %964 = vdwg.mxu0
    %v965 = vadd.f32 %v923, %v961
    %v966 = vadd.f32 %v925, %v963
    %v967 = vsel %vm474, %v866, 0.0
    %v968 = vsel %vm475, %v867, 0.0
    %v969 = vadd.f32 %v967, %v968
    %v970 = vrot.slane %v969, 4
    %v971 = vadd.f32 %v969, %v970
    %v972 = vrot.slane %v971, 2
    %v973 = vadd.f32 %v971, %v972
    %v974 = vrot.slane %v973, 1
    %v975 = vadd.f32 %v973, %v974
    %v976 = vadd.f32 %v975, 0.0
    %v977 = vsel %vm474, %v965, 0.0
    %v978 = vsel %vm475, %v966, 0.0
    %v979 = vadd.f32 %v977, %v978
    %v980 = vrot.slane %v979, 4
    %v981 = vadd.f32 %v979, %v980
    %v982 = vrot.slane %v981, 2
    %v983 = vadd.f32 %v981, %v982
    %v984 = vrot.slane %v983, 1
    %v985 = vadd.f32 %v983, %v984
    %v986 = vadd.f32 %v976, %v985
    %v987 = vmul.f32 %v986, 0.071428575
    %v988 = vsub.f32 %v866, %v987
    %v989 = vsub.f32 %v867, %v987
    %v990 = vmul.f32 %v988, %v988
    %v991 = vmul.f32 %v989, %v989
    %v992 = vsel %vm474, %v990, 0.0
    %v993 = vsel %vm475, %v991, 0.0
    %v994 = vadd.f32 %v992, %v993
    %v995 = vrot.slane %v994, 4
    %v996 = vadd.f32 %v994, %v995
    %v997 = vrot.slane %v996, 2
    %v998 = vadd.f32 %v996, %v997
    %v999 = vrot.slane %v998, 1
    %v1000 = vadd.f32 %v998, %v999
    %v1001 = vadd.f32 %v1000, 0.0
    %v1002 = vsub.f32 %v965, %v987
    %v1003 = vsub.f32 %v966, %v987
    %v1004 = vmul.f32 %v1002, %v1002
    %v1005 = vmul.f32 %v1003, %v1003
    %v1006 = vsel %vm474, %v1004, 0.0
    %v1007 = vsel %vm475, %v1005, 0.0
    %v1008 = vadd.f32 %v1006, %v1007
    %v1009 = vrot.slane %v1008, 4
    %v1010 = vadd.f32 %v1008, %v1009
    %v1011 = vrot.slane %v1010, 2
    %v1012 = vadd.f32 %v1010, %v1011
    %v1013 = vrot.slane %v1012, 1
    %v1014 = vadd.f32 %v1012, %v1013
    %v1015 = vadd.f32 %v1001, %v1014
    %v1016 = vmul.f32 %v1015, 0.071428575
    %v1017 = vadd.f32 %v1016, 1e-05
    %v1018 = vrsqrt.pop %v1017
    %v1019 = vmul.f32 %v1018, %v1017
    %v1020 = vmul.f32 %v1019, %v1018
    %v1021 = vmul.f32 0.5, %v1020
    %v1022 = vsub.f32 1.5, %v1021
    %v1023 = vmul.f32 %v1018, %v1022
    %vm1024 = vweird.f32 %v1017
    %vm1025 = vweird.f32 %v1018
    %vm1026 = vmor %vm1024, %vm1025
    %v1027 = vsel %vm1026, %v1018, %v1023
    %v1028 = vld [vmem:[%s5] sm:$0x1]
    %v1029 = vmul.f32 %v1027, %v1028
    %v1030 = vperm.slane %v1029, 0
    %v1031 = vmul.f32 %v988, %v1030
    %v1032 = vmul.f32 %v989, %v1030
    %v1033 = vld [vmem:[%s6] sm:$0x1]
    %v1035 = vperm.slane %v1033, 0
    %v1037 = vadd.f32 %v1031, %v1035
    %v1038 = vadd.f32 %v1032, %v1035
    %v1039 = vmax.f32 %v1037, 0.0
    %v1040 = vmax.f32 %v1038, 0.0
    %v1041 = vsel %vm474, %v1039, 0.0
    %v1042 = vsel %vm475, %v1040, 0.0
    %v1043 = vmul.f32 %v1002, %v1030
    %v1044 = vmul.f32 %v1003, %v1030
    %v1045 = vadd.f32 %v1043, %v1035
    %v1046 = vadd.f32 %v1044, %v1035
    %v1047 = vmax.f32 %v1045, 0.0
    %v1048 = vmax.f32 %v1046, 0.0
    %v1049 = vsel %vm474, %v1047, 0.0
    %v1050 = vsel %vm475, %v1048, 0.0
    %v1051 = vpack.c.bf16 %v1041, %v1041
    %v1052 = vpack.c.bf16 %v1042, %v1042
    %1053 = vst [vmem:[#allocation3 + $0x8] sm:$0xf] %v1051
    %1054 = vst [vmem:[#allocation3 + $0xc] sm:$0xf] %v1052
    %v1055 = vpack.c.bf16 %v1049, %v1049
    %v1056 = vpack.c.bf16 %v1050, %v1050
    %s1057 = scalar_lea.vmem [#allocation3], 24
    %1058 = vst [vmem:[%s1057 + $0x8] sm:$0xf] %v1055
    %1059 = vst [vmem:[%s1057 + $0xc] sm:$0xf] %v1056
    %v1060 = vld [vmem:[#allocation3 + $0x4] sm:$0x8]
    %v1061 = vld [vmem:[#allocation3 + $0x8] sm:$0xf]
    %v1062 = vld [vmem:[#allocation3 + $0xc] sm:$0xf]
    %v1063 = vld [vmem:[#allocation11] sm:$0xf]
    %v1064 = vld [vmem:[#allocation11 + $0x4] sm:$0xf]
    %v1065 = vld [vmem:[#allocation11 + $0x8] sm:$0xf]
    %v1066 = vld [vmem:[#allocation11 + $0xc] sm:$0xf]
    %v1067 = vld [vmem:[#allocation11 + $0x10] sm:$0xf]
    %v1068 = vld [vmem:[#allocation11 + $0x14] sm:$0xf]
    %v1069 = vld [vmem:[#allocation11 + $0x18] sm:$0xf]
    %v1070 = vld [vmem:[#allocation11 + $0x1c] sm:$0xf]
    %v1071 = vld [vmem:[#allocation11 + $0x20] sm:$0xf]
    %v1072 = vld [vmem:[#allocation11 + $0x24] sm:$0xf]
    %v1073 = vld [vmem:[#allocation11 + $0x28] sm:$0xf]
    %v1074 = vld [vmem:[#allocation11 + $0x2c] sm:$0xf]
    %v1075 = vld [vmem:[#allocation11 + $0x30] sm:$0xf]
    %v1076 = vld [vmem:[#allocation11 + $0x34] sm:$0xf]
    %v1077 = vld [vmem:[#allocation11 + $0x38] sm:$0xf]
    %v1078 = vld [vmem:[#allocation11 + $0x3c] sm:$0xf]
    %s1079 = scalar_lea.vmem [#allocation11], 64
    %v1080 = vld [vmem:[%s1079] sm:$0xf]
    %v1081 = vld [vmem:[%s1079 + $0x4] sm:$0xf]
    %v1082 = vld [vmem:[%s1079 + $0x8] sm:$0xf]
    %v1083 = vld [vmem:[%s1079 + $0xc] sm:$0xf]
    %v1084 = vld [vmem:[%s1079 + $0x10] sm:$0xf]
    %v1085 = vld [vmem:[%s1079 + $0x14] sm:$0xf]
    %v1086 = vld [vmem:[%s1079 + $0x18] sm:$0xf]
    %v1087 = vld [vmem:[%s1079 + $0x1c] sm:$0xf]
    %v1088 = vld [vmem:[%s1079 + $0x20] sm:$0xf]
    %v1089 = vld [vmem:[%s1079 + $0x24] sm:$0xf]
    %v1090 = vld [vmem:[%s1079 + $0x28] sm:$0xf]
    %v1091 = vld [vmem:[%s1079 + $0x2c] sm:$0xf]
    %v1092 = vld [vmem:[%s1079 + $0x30] sm:$0xf]
    %v1093 = vld [vmem:[%s1079 + $0x34] sm:$0xf]
    %v1094 = vld [vmem:[%s1079 + $0x38] sm:$0xf]
    %v1095 = vld [vmem:[%s1079 + $0x3c] sm:$0xf]
    %v1098 = vunpack.c.l.b16 %v1061
    %v1099 = vunpack.c.l.b16 %v1062
    %v1100 = vpack.c.b16 %v1099, %v1098
    %v1118 = vunpack.c.l.b16 %v1080
    %v1119 = vunpack.c.l.b16 %v1081
    %v1120 = vunpack.c.l.b16 %v1082
    %v1121 = vunpack.c.l.b16 %v1083
    %v1122 = vunpack.c.l.b16 %v1084
    %v1123 = vunpack.c.l.b16 %v1085
    %v1124 = vunpack.c.l.b16 %v1086
    %v1125 = vunpack.c.l.b16 %v1087
    %v1126 = vunpack.c.l.b16 %v1088
    %v1127 = vunpack.c.l.b16 %v1089
    %v1128 = vunpack.c.l.b16 %v1090
    %v1129 = vunpack.c.l.b16 %v1091
    %v1130 = vunpack.c.l.b16 %v1092
    %v1131 = vunpack.c.l.b16 %v1093
    %v1132 = vunpack.c.l.b16 %v1094
    %v1133 = vunpack.c.l.b16 %v1095
    %v1134 = vpack.c.b16 %v1119, %v1118
    %v1135 = vpack.c.b16 %v1121, %v1120
    %v1136 = vpack.c.b16 %v1123, %v1122
    %v1137 = vpack.c.b16 %v1125, %v1124
    %v1138 = vpack.c.b16 %v1127, %v1126
    %v1139 = vpack.c.b16 %v1129, %v1128
    %v1140 = vpack.c.b16 %v1131, %v1130
    %v1141 = vpack.c.b16 %v1133, %v1132
    %1150 = vmatpush.bf16.msra.mxu0 %v1141
    %1151 = vmatpush.bf16.msra.mxu0 %v1140
    %1152 = vmatpush.bf16.msra.mxu0 %v1139
    %1153 = vmatpush.bf16.msra.mxu0 %v1138
    %1154 = vmatpush.bf16.msra.mxu0 %v1137
    %1155 = vmatpush.bf16.msra.mxu0 %v1136
    %1156 = vmatpush.bf16.msra.mxu0 %v1135
    %1157 = vmatpush.bf16.msra.mxu0 %v1134
    %1158 = vmatmul.bf16.gmra.mxu0 %v1100
    %v1159 = vpop.f32.mrf.mxu0
    %v1160 = vadd.f32 0.0, %v1159
    %v1161 = vpop.f32.mrf.mxu0
    %v1162 = vadd.f32 0.0, %v1161
    %1163 = vdwg.mxu0
    %v1165 = vunpack.c.l.b16 %v1060
    %v1166 = vpack.c.b16 %v1098, %v1165
    %v1167 = vpack.c.b16 %v1099, %v1099
    %v1169 = vshrl.u32 %v1166, 16
    %v1171 = vrot.slane %v1169, 3
    %v1172 = vshll.u32 %v1166, 16
    %v1174 = vrot.slane %v1172, 4
    %v1175 = vor.u32 %v1171, %v1174
    %v1177 = vshrl.u32 %v1167, 16
    %v1179 = vrot.slane %v1177, 3
    %v1180 = vshll.u32 %v1167, 16
    %v1182 = vrot.slane %v1180, 4
    %v1183 = vor.u32 %v1179, %v1182
    %v1184 = vsel %vm682, %v1175, %v1183
    %v1202 = vunpack.c.l.b16 %v1063
    %v1203 = vunpack.c.l.b16 %v1064
    %v1204 = vunpack.c.l.b16 %v1065
    %v1205 = vunpack.c.l.b16 %v1066
    %v1206 = vunpack.c.l.b16 %v1067
    %v1207 = vunpack.c.l.b16 %v1068
    %v1208 = vunpack.c.l.b16 %v1069
    %v1209 = vunpack.c.l.b16 %v1070
    %v1210 = vunpack.c.l.b16 %v1071
    %v1211 = vunpack.c.l.b16 %v1072
    %v1212 = vunpack.c.l.b16 %v1073
    %v1213 = vunpack.c.l.b16 %v1074
    %v1214 = vunpack.c.l.b16 %v1075
    %v1215 = vunpack.c.l.b16 %v1076
    %v1216 = vunpack.c.l.b16 %v1077
    %v1217 = vunpack.c.l.b16 %v1078
    %v1218 = vpack.c.b16 %v1203, %v1202
    %v1219 = vpack.c.b16 %v1205, %v1204
    %v1220 = vpack.c.b16 %v1207, %v1206
    %v1221 = vpack.c.b16 %v1209, %v1208
    %v1222 = vpack.c.b16 %v1211, %v1210
    %v1223 = vpack.c.b16 %v1213, %v1212
    %v1224 = vpack.c.b16 %v1215, %v1214
    %v1225 = vpack.c.b16 %v1217, %v1216
    %1234 = vmatpush.bf16.msra.mxu0 %v1225
    %1235 = vmatpush.bf16.msra.mxu0 %v1224
    %1236 = vmatpush.bf16.msra.mxu0 %v1223
    %1237 = vmatpush.bf16.msra.mxu0 %v1222
    %1238 = vmatpush.bf16.msra.mxu0 %v1221
    %1239 = vmatpush.bf16.msra.mxu0 %v1220
    %1240 = vmatpush.bf16.msra.mxu0 %v1219
    %1241 = vmatpush.bf16.msra.mxu0 %v1218
    %1242 = vmatmul.bf16.gmra.mxu0 %v1184
    %v1243 = vpop.f32.mrf.mxu0
    %v1244 = vadd.f32 %v1160, %v1243
    %v1245 = vpop.f32.mrf.mxu0
    %v1246 = vadd.f32 %v1162, %v1245
    %1247 = vdwg.mxu0
    %v1248 = vld [vmem:[#allocation3 + $0x8] sm:$0xf]
    %v1249 = vld [vmem:[#allocation3 + $0xc] sm:$0xf]
    %v1250 = vld [vmem:[#allocation3 + $0x10] sm:$0x1]
    %s1251 = scalar_lea.vmem [#allocation11], 128
    %v1252 = vld [vmem:[%s1251] sm:$0xf]
    %v1253 = vld [vmem:[%s1251 + $0x4] sm:$0xf]
    %v1254 = vld [vmem:[%s1251 + $0x8] sm:$0xf]
    %v1255 = vld [vmem:[%s1251 + $0xc] sm:$0xf]
    %v1256 = vld [vmem:[%s1251 + $0x10] sm:$0xf]
    %v1257 = vld [vmem:[%s1251 + $0x14] sm:$0xf]
    %v1258 = vld [vmem:[%s1251 + $0x18] sm:$0xf]
    %v1259 = vld [vmem:[%s1251 + $0x1c] sm:$0xf]
    %v1260 = vld [vmem:[%s1251 + $0x20] sm:$0xf]
    %v1261 = vld [vmem:[%s1251 + $0x24] sm:$0xf]
    %v1262 = vld [vmem:[%s1251 + $0x28] sm:$0xf]
    %v1263 = vld [vmem:[%s1251 + $0x2c] sm:$0xf]
    %v1264 = vld [vmem:[%s1251 + $0x30] sm:$0xf]
    %v1265 = vld [vmem:[%s1251 + $0x34] sm:$0xf]
    %v1266 = vld [vmem:[%s1251 + $0x38] sm:$0xf]
    %v1267 = vld [vmem:[%s1251 + $0x3c] sm:$0xf]
    %v1271 = vunpack.c.l.b16 %v1248
    %v1272 = vunpack.c.l.b16 %v1249
    %v1273 = vunpack.c.l.b16 %v1250
    %v1274 = vpack.c.b16 %v1272, %v1271
    %v1275 = vpack.c.b16 %v1273, %v1273
    %v1277 = vshrl.u32 %v1274, 16
    %v1279 = vshll.u32 %v1274, 16
    %v1281 = vrot.slane %v1279, 1
    %v1282 = vor.u32 %v1277, %v1281
    %v1284 = vshll.u32 %v1275, 16
    %v1286 = vrot.slane %v1284, 1
    %v1287 = vsel %vm165, %v1282, %v1286
    %v1305 = vunpack.c.l.b16 %v1252
    %v1306 = vunpack.c.l.b16 %v1253
    %v1307 = vunpack.c.l.b16 %v1254
    %v1308 = vunpack.c.l.b16 %v1255
    %v1309 = vunpack.c.l.b16 %v1256
    %v1310 = vunpack.c.l.b16 %v1257
    %v1311 = vunpack.c.l.b16 %v1258
    %v1312 = vunpack.c.l.b16 %v1259
    %v1313 = vunpack.c.l.b16 %v1260
    %v1314 = vunpack.c.l.b16 %v1261
    %v1315 = vunpack.c.l.b16 %v1262
    %v1316 = vunpack.c.l.b16 %v1263
    %v1317 = vunpack.c.l.b16 %v1264
    %v1318 = vunpack.c.l.b16 %v1265
    %v1319 = vunpack.c.l.b16 %v1266
    %v1320 = vunpack.c.l.b16 %v1267
    %v1321 = vpack.c.b16 %v1306, %v1305
    %v1322 = vpack.c.b16 %v1308, %v1307
    %v1323 = vpack.c.b16 %v1310, %v1309
    %v1324 = vpack.c.b16 %v1312, %v1311
    %v1325 = vpack.c.b16 %v1314, %v1313
    %v1326 = vpack.c.b16 %v1316, %v1315
    %v1327 = vpack.c.b16 %v1318, %v1317
    %v1328 = vpack.c.b16 %v1320, %v1319
    %1337 = vmatpush.bf16.msra.mxu0 %v1328
    %1338 = vmatpush.bf16.msra.mxu0 %v1327
    %1339 = vmatpush.bf16.msra.mxu0 %v1326
    %1340 = vmatpush.bf16.msra.mxu0 %v1325
    %1341 = vmatpush.bf16.msra.mxu0 %v1324
    %1342 = vmatpush.bf16.msra.mxu0 %v1323
    %1343 = vmatpush.bf16.msra.mxu0 %v1322
    %1344 = vmatpush.bf16.msra.mxu0 %v1321
    %1345 = vmatmul.bf16.gmra.mxu0 %v1287
    %v1346 = vpop.f32.mrf.mxu0
    %v1347 = vadd.f32 0.0, %v1346
    %v1348 = vpop.f32.mrf.mxu0
    %v1349 = vadd.f32 0.0, %v1348
    %1350 = vdwg.mxu0
    %v1351 = vadd.f32 %v1244, %v1347
    %v1352 = vadd.f32 %v1246, %v1349
    %v1353 = vld [vmem:[%s1057 + $0x4] sm:$0x8]
    %v1354 = vld [vmem:[%s1057 + $0x8] sm:$0xf]
    %v1355 = vld [vmem:[%s1057 + $0xc] sm:$0xf]
    %v1358 = vunpack.c.l.b16 %v1354
    %v1359 = vunpack.c.l.b16 %v1355
    %v1360 = vpack.c.b16 %v1359, %v1358
    %1362 = vmatpush.bf16.msra.mxu0 %v1141
    %1363 = vmatpush.bf16.msra.mxu0 %v1140
    %1364 = vmatpush.bf16.msra.mxu0 %v1139
    %1365 = vmatpush.bf16.msra.mxu0 %v1138
    %1366 = vmatpush.bf16.msra.mxu0 %v1137
    %1367 = vmatpush.bf16.msra.mxu0 %v1136
    %1368 = vmatpush.bf16.msra.mxu0 %v1135
    %1369 = vmatpush.bf16.msra.mxu0 %v1134
    %1370 = vmatmul.bf16.gmra.mxu0 %v1360
    %v1371 = vpop.f32.mrf.mxu0
    %v1372 = vadd.f32 0.0, %v1371
    %v1373 = vpop.f32.mrf.mxu0
    %v1374 = vadd.f32 0.0, %v1373
    %1375 = vdwg.mxu0
    %v1377 = vunpack.c.l.b16 %v1353
    %v1378 = vpack.c.b16 %v1358, %v1377
    %v1379 = vpack.c.b16 %v1359, %v1359
    %v1381 = vshrl.u32 %v1378, 16
    %v1383 = vrot.slane %v1381, 3
    %v1384 = vshll.u32 %v1378, 16
    %v1386 = vrot.slane %v1384, 4
    %v1387 = vor.u32 %v1383, %v1386
    %v1389 = vshrl.u32 %v1379, 16
    %v1391 = vrot.slane %v1389, 3
    %v1392 = vshll.u32 %v1379, 16
    %v1394 = vrot.slane %v1392, 4
    %v1395 = vor.u32 %v1391, %v1394
    %v1396 = vsel %vm682, %v1387, %v1395
    %1398 = vmatpush.bf16.msra.mxu0 %v1225
    %1399 = vmatpush.bf16.msra.mxu0 %v1224
    %1400 = vmatpush.bf16.msra.mxu0 %v1223
    %1401 = vmatpush.bf16.msra.mxu0 %v1222
    %1402 = vmatpush.bf16.msra.mxu0 %v1221
    %1403 = vmatpush.bf16.msra.mxu0 %v1220
    %1404 = vmatpush.bf16.msra.mxu0 %v1219
    %1405 = vmatpush.bf16.msra.mxu0 %v1218
    %1406 = vmatmul.bf16.gmra.mxu0 %v1396
    %v1407 = vpop.f32.mrf.mxu0
    %v1408 = vadd.f32 %v1372, %v1407
    %v1409 = vpop.f32.mrf.mxu0
    %v1410 = vadd.f32 %v1374, %v1409
    %1411 = vdwg.mxu0
    %v1412 = vld [vmem:[%s1057 + $0x8] sm:$0xf]
    %v1413 = vld [vmem:[%s1057 + $0xc] sm:$0xf]
    %v1414 = vld [vmem:[%s1057 + $0x10] sm:$0x1]
    %v1418 = vunpack.c.l.b16 %v1412
    %v1419 = vunpack.c.l.b16 %v1413
    %v1420 = vunpack.c.l.b16 %v1414
    %v1421 = vpack.c.b16 %v1419, %v1418
    %v1422 = vpack.c.b16 %v1420, %v1420
    %v1424 = vshrl.u32 %v1421, 16
    %v1426 = vshll.u32 %v1421, 16
    %v1428 = vrot.slane %v1426, 1
    %v1429 = vor.u32 %v1424, %v1428
    %v1431 = vshll.u32 %v1422, 16
    %v1433 = vrot.slane %v1431, 1
    %v1434 = vsel %vm165, %v1429, %v1433
    %1436 = vmatpush.bf16.msra.mxu0 %v1328
    %1437 = vmatpush.bf16.msra.mxu0 %v1327
    %1438 = vmatpush.bf16.msra.mxu0 %v1326
    %1439 = vmatpush.bf16.msra.mxu0 %v1325
    %1440 = vmatpush.bf16.msra.mxu0 %v1324
    %1441 = vmatpush.bf16.msra.mxu0 %v1323
    %1442 = vmatpush.bf16.msra.mxu0 %v1322
    %1443 = vmatpush.bf16.msra.mxu0 %v1321
    %1444 = vmatmul.bf16.gmra.mxu0 %v1434
    %v1445 = vpop.f32.mrf.mxu0
    %v1446 = vadd.f32 0.0, %v1445
    %v1447 = vpop.f32.mrf.mxu0
    %v1448 = vadd.f32 0.0, %v1447
    %1449 = vdwg.mxu0
    %v1450 = vadd.f32 %v1408, %v1446
    %v1451 = vadd.f32 %v1410, %v1448
    %v1452 = vsel %vm474, %v1351, 0.0
    %v1453 = vsel %vm475, %v1352, 0.0
    %v1454 = vadd.f32 %v1452, %v1453
    %v1455 = vrot.slane %v1454, 4
    %v1456 = vadd.f32 %v1454, %v1455
    %v1457 = vrot.slane %v1456, 2
    %v1458 = vadd.f32 %v1456, %v1457
    %v1459 = vrot.slane %v1458, 1
    %v1460 = vadd.f32 %v1458, %v1459
    %v1461 = vadd.f32 %v1460, 0.0
    %v1462 = vsel %vm474, %v1450, 0.0
    %v1463 = vsel %vm475, %v1451, 0.0
    %v1464 = vadd.f32 %v1462, %v1463
    %v1465 = vrot.slane %v1464, 4
    %v1466 = vadd.f32 %v1464, %v1465
    %v1467 = vrot.slane %v1466, 2
    %v1468 = vadd.f32 %v1466, %v1467
    %v1469 = vrot.slane %v1468, 1
    %v1470 = vadd.f32 %v1468, %v1469
    %v1471 = vadd.f32 %v1461, %v1470
    %v1472 = vmul.f32 %v1471, 0.071428575
    %v1473 = vsub.f32 %v1351, %v1472
    %v1474 = vsub.f32 %v1352, %v1472
    %v1475 = vmul.f32 %v1473, %v1473
    %v1476 = vmul.f32 %v1474, %v1474
    %v1477 = vsel %vm474, %v1475, 0.0
    %v1478 = vsel %vm475, %v1476, 0.0
    %v1479 = vadd.f32 %v1477, %v1478
    %v1480 = vrot.slane %v1479, 4
    %v1481 = vadd.f32 %v1479, %v1480
    %v1482 = vrot.slane %v1481, 2
    %v1483 = vadd.f32 %v1481, %v1482
    %v1484 = vrot.slane %v1483, 1
    %v1485 = vadd.f32 %v1483, %v1484
    %v1486 = vadd.f32 %v1485, 0.0
    %v1487 = vsub.f32 %v1450, %v1472
    %v1488 = vsub.f32 %v1451, %v1472
    %v1489 = vmul.f32 %v1487, %v1487
    %v1490 = vmul.f32 %v1488, %v1488
    %v1491 = vsel %vm474, %v1489, 0.0
    %v1492 = vsel %vm475, %v1490, 0.0
    %v1493 = vadd.f32 %v1491, %v1492
    %v1494 = vrot.slane %v1493, 4
    %v1495 = vadd.f32 %v1493, %v1494
    %v1496 = vrot.slane %v1495, 2
    %v1497 = vadd.f32 %v1495, %v1496
    %v1498 = vrot.slane %v1497, 1
    %v1499 = vadd.f32 %v1497, %v1498
    %v1500 = vadd.f32 %v1486, %v1499
    %v1501 = vmul.f32 %v1500, 0.071428575
    %v1502 = vadd.f32 %v1501, 1e-05
    %v1503 = vrsqrt.pop %v1502
    %v1504 = vmul.f32 %v1503, %v1502
    %v1505 = vmul.f32 %v1504, %v1503
    %v1506 = vmul.f32 0.5, %v1505
    %v1507 = vsub.f32 1.5, %v1506
    %v1508 = vmul.f32 %v1503, %v1507
    %vm1509 = vweird.f32 %v1502
    %vm1510 = vweird.f32 %v1503
    %vm1511 = vmor %vm1509, %vm1510
    %v1512 = vsel %vm1511, %v1503, %v1508
    %v1513 = vld [vmem:[%s8] sm:$0x1]
    %v1514 = vmul.f32 %v1512, %v1513
    %v1515 = vperm.slane %v1514, 0
    %v1516 = vmul.f32 %v1473, %v1515
    %v1517 = vmul.f32 %v1474, %v1515
    %v1518 = vld [vmem:[%s9] sm:$0x1]
    %v1520 = vperm.slane %v1518, 0
    %v1522 = vadd.f32 %v1516, %v1520
    %v1523 = vadd.f32 %v1517, %v1520
    %v1524 = vsel %vm474, %v1522, 0.0
    %v1525 = vsel %vm475, %v1523, 0.0
    %v1526 = vmul.f32 %v1487, %v1515
    %v1527 = vmul.f32 %v1488, %v1515
    %v1528 = vadd.f32 %v1526, %v1520
    %v1529 = vadd.f32 %v1527, %v1520
    %v1530 = vsel %vm474, %v1528, 0.0
    %v1531 = vsel %vm475, %v1529, 0.0
    %v1532 = vld [vmem:[#allocation4] sm:$0xff]
    %v1533 = vld [vmem:[#allocation4 + $0x8] sm:$0xff]
    %v1534 = vadd.f32 %v1524, %v1532
    %v1535 = vadd.f32 %v1525, %v1533
    %v1536 = vmax.f32 %v1534, 0.0
    %v1537 = vmax.f32 %v1535, 0.0
    %1538 = vst [vmem:[#allocation13] sm:$0xff] %v1536
    %1539 = vst [vmem:[#allocation13 + $0x8] sm:$0xff] %v1537
    %v1540 = vld [vmem:[%s566] sm:$0xff]
    %v1541 = vld [vmem:[%s566 + $0x8] sm:$0xff]
    %v1542 = vadd.f32 %v1530, %v1540
    %v1543 = vadd.f32 %v1531, %v1541
    %v1544 = vmax.f32 %v1542, 0.0
    %v1545 = vmax.f32 %v1543, 0.0
    %s1546 = scalar_lea.vmem [#allocation13], 16
    %1547 = vst [vmem:[%s1546] sm:$0xff] %v1544
    %1548 = vst [vmem:[%s1546 + $0x8] sm:$0xff] %v1545
    // Predicated region
    $region58: #{tpu_custom_call.1} parent=1 // pred_check
      _
    $region59: #{tpu_custom_call.1} parent=1 // pred_check_branch
      %1550 = sbr.rel (0) target = $region61
    $region60: #{tpu_custom_call.1} parent=1 // pred_region
      %1552 = vsyncadd [#allocation7], 0
      %s1553 = sshll.u32 [#allocation13], 4
      %s1554 = int_to_ptr.vmem [resolvable:$true] %s1553
      %s1555 = sshll.u32 %s10, 4
      %s1556 = int_to_ptr.hbm [resolvable:$true] %s1555
      %1561 = dma.vmem_to_hbm [thread:$0]  %s1554, 512, %s1556, [#allocation7], 128, 128, 8
    $region61: #{tpu_custom_call.1} parent=1 // pred_fallthru
      _
    // Predicated region
    $region62: #{tpu_custom_call.1} parent=1 // pred_check
      _
    $region63: #{tpu_custom_call.1} parent=1 // pred_check_branch
      %1563 = sbr.rel (0) target = $region65
    $region64: #{tpu_custom_call.1} parent=1 // pred_region
      %1565 = dma.done [#allocation7], 512
    $region65: #{tpu_custom_call.1} parent=1 // pred_fallthru
      _
    %1566 = vsyncpa [#allocation6], 1
    %1567 = vsyncpa [#allocation9], 1
    %1568 = vsyncpa [#allocation12], 1
    %1569 = vsyncpa [#allocation7], 1

</llo_original>
